<compile_context>
chip_gen: v6e
topology: v6e:2x2x1
jax: 0.10.0
libtpu: 0.0.40
codegen_flags: <defaults>
</compile_context>

<pallas_src>
import functools
import math

import jax
import jax.numpy as jnp
import numpy as np
from jax import lax
from jax.experimental import pallas as pl
from jax.experimental.pallas import tpu as pltpu


def _tplstm_seq_kernel(gates_x_ref, T_ref, w_hh_ref, w_dec_ref, b_dec_ref,
                       h0_ref, c0_ref,
                       h_out_ref, c_out_ref,
                       *, hidden_size, seq_len):
    """Runs the full recurrence over the sequence in one grid invocation.

    gates_x_ref : (S, B, 4H)  precomputed x@W_ih^T + (b_ih + b_hh)
    T_ref       : (S, B, 1)   precomputed 1 / log(dt + e)
    w_hh_ref    : (H, 4H)     W_hh^T   (row-major matmul)
    w_dec_ref   : (H, H)      W_decomp^T
    b_dec_ref   : (1, H)
    h0/c0       : (B, H)
    h_out/c_out : (S, B, H)
    """
    H = hidden_size

    # Hoist loop-invariant loads out of the recurrence.
    w_hh = w_hh_ref[...]      # (H, 4H)
    w_dec = w_dec_ref[...]    # (H, H)
    b_dec = b_dec_ref[...]    # (1, H)

    def step(s, carry):
        h_prev, c_prev = carry                            # (B, H) each

        # Subspace decomposition of the previous cell state (TLSTM).
        c_st = jnp.tanh(
            jnp.dot(c_prev, w_dec, preferred_element_type=jnp.float32)
            + b_dec)                                      # (B, H)
        cpt = c_prev - c_st + T_ref[s] * c_st             # time-adjusted memory

        # Recurrent contribution; input contribution was precomputed.
        gates = gates_x_ref[s] + jnp.dot(
            h_prev, w_hh, preferred_element_type=jnp.float32)   # (B, 4H)

        ingate = jax.nn.sigmoid(gates[:, 0 * H:1 * H])
        forgetgate = jax.nn.sigmoid(gates[:, 1 * H:2 * H])
        cellgate = jnp.tanh(gates[:, 2 * H:3 * H])
        outgate = jax.nn.sigmoid(gates[:, 3 * H:4 * H])

        ct = forgetgate * cpt + ingate * cellgate
        ht = outgate * jnp.tanh(ct)

        h_out_ref[s] = ht.astype(h_out_ref.dtype)
        c_out_ref[s] = ct.astype(c_out_ref.dtype)
        return ht, ct

    # Short fixed trip count -> unroll for LLO scheduler visibility.
    lax.fori_loop(0, seq_len, step, (h0_ref[...], c0_ref[...]),
                  unroll=(seq_len <= 32))


def tplstm_forward(x, hx, params):
    """x: (S, B, input_size); hx = (h0, c0) each (1, B, H). Returns the same
    structure as the PyTorch module: (list_of_h, (h_T, c_T), list_of_c)."""
    S, B, in_size = x.shape
    H = params["weight_hh"].shape[1]
    D = in_size - 1

    x = x.astype(jnp.float32)
    w_ih_t = params["weight_ih"].T.astype(jnp.float32)      # (D, 4H)
    w_hh_t = params["weight_hh"].T.astype(jnp.float32)      # (H, 4H)
    w_dec_t = params["W_decomp"].T.astype(jnp.float32)      # (H, H)
    b_gates = (params["bias_ih"] + params["bias_hh"]).reshape(1, 1, 4 * H)
    b_dec = params["b_decomp"].reshape(1, H).astype(jnp.float32)

    # Hoisted out of the recurrence (plain XLA, one shot for the whole seq):
    #   input projection + fused biases, and the elapsed-time decay factor.
    gates_x = (jnp.einsum("sbd,dk->sbk", x[:, :, :D], w_ih_t)
               + b_gates.astype(jnp.float32))                # (S, B, 4H)
    T_all = 1.0 / jnp.log(x[:, :, D:] + 2.7183)              # (S, B, 1)

    h0 = hx[0].reshape(B, H).astype(jnp.float32)
    c0 = hx[1].reshape(B, H).astype(jnp.float32)

    kernel = functools.partial(_tplstm_seq_kernel, hidden_size=H, seq_len=S)

    def full(shape):
        n = len(shape)
        return pl.BlockSpec(shape, lambda *_: (0,) * n)

    h_out, c_out = pl.pallas_call(
        kernel,
        out_shape=(jax.ShapeDtypeStruct((S, B, H), jnp.float32),
                   jax.ShapeDtypeStruct((S, B, H), jnp.float32)),
        grid_spec=pltpu.PrefetchScalarGridSpec(
            num_scalar_prefetch=0,
            grid=(1,),                     # whole sequence in one invocation
            in_specs=[
                full((S, B, 4 * H)),       # precomputed input gates
                full((S, B, 1)),           # precomputed time decay
                full((H, 4 * H)),          # W_hh^T
                full((H, H)),              # W_decomp^T
                full((1, H)),              # b_decomp
                full((B, H)),              # h0
                full((B, H)),              # c0
            ],
            out_specs=[
                full((S, B, H)),
                full((S, B, H)),
            ],
        ),
        compiler_params=pltpu.CompilerParams(
            dimension_semantics=("arbitrary",)),   # recurrence is sequential
    )(gates_x, T_all, w_hh_t, w_dec_t, b_dec, h0, c0)

    # Mirror the PyTorch return structure (each element (1, B, H)).
    outputh = [h_out[i][None] for i in range(S)]
    outputc = [c_out[i][None] for i in range(S)]
    hx_final = (h_out[-1][None], c_out[-1][None])
    return outputh, hx_final, outputc


def tplstm_reference(x, hx, params):
    """Pure-JAX reference matching the PyTorch forward exactly."""
    h, c = hx                                                  # (1, B, H)
    w_ih, w_hh, w_dec = params["weight_ih"], params["weight_hh"], params["W_decomp"]
    b_ih, b_hh, b_dec = params["bias_ih"], params["bias_hh"], params["b_decomp"]
    H = w_hh.shape[1]
    outs_h, outs_c = [], []
    for i in range(x.shape[0]):
        step = x[i]                                            # (B, input_size)
        t = step[:, -1]                                        # (B,)
        xt = step[:, :-1]                                      # (B, D)
        T = (1.0 / jnp.log(t + 2.7183))[:, None] * jnp.ones((1, H))
        c_st = jnp.tanh(c @ w_dec.T + b_dec)                   # (1, B, H)
        c_st_dis = (T * c_st[0])[None]
        cpt = c - c_st + c_st_dis
        gates = xt @ w_ih.T + b_ih + h @ w_hh.T + b_hh         # (1, B, 4H)
        ig, fg, cg, og = jnp.split(gates, 4, axis=2)
        ig, fg, og = jax.nn.sigmoid(ig), jax.nn.sigmoid(fg), jax.nn.sigmoid(og)
        cg = jnp.tanh(cg)
        c = fg * cpt + ig * cg
        h = og * jnp.tanh(c)
        outs_h.append(h)
        outs_c.append(c)
    return outs_h, (h, c), outs_c


if __name__ == "__main__":
    key = jax.random.PRNGKey(0)
    seq, batch, hidden = 8, 4, 32
    input_size = 11                       # module arg; feature dim D = input_size - 1
    D = input_size - 1
    stdv = 1.0 / math.sqrt(hidden)

    keys = jax.random.split(key, 10)
    u = lambda k, shape: jax.random.uniform(k, shape, jnp.float32, -stdv, stdv)
    params = {
        "weight_ih": u(keys[0], (4 * hidden, D)),
        "weight_hh": u(keys[1], (4 * hidden, hidden)),
        "W_decomp":  u(keys[2], (hidden, hidden)),
        "bias_ih":   u(keys[3], (4 * hidden,)),
        "bias_hh":   u(keys[4], (4 * hidden,)),
        "b_decomp":  u(keys[5], (hidden,)),
    }

    x_feat = jax.random.normal(keys[6], (seq, batch, D), jnp.float32)
    dt = jax.random.uniform(keys[7], (seq, batch, 1), jnp.float32, minval=0.0, maxval=10.0)
    x = jnp.concatenate([x_feat, dt], axis=2)                  # (S, B, input_size)

    h0 = 0.1 * jax.random.normal(keys[8], (1, batch, hidden), jnp.float32)
    c0 = 0.1 * jax.random.normal(keys[9], (1, batch, hidden), jnp.float32)

    outputh, hx_final, outputc = tplstm_forward(x, (h0, c0), params)
    jax.block_until_ready(hx_final)

    # Correctness check against the pure-JAX reference of the PyTorch forward.
    rh, (rhf, rcf), rc = tplstm_reference(x, (h0, c0), params)
    np.testing.assert_allclose(np.asarray(hx_final[0]), np.asarray(rhf), rtol=2e-2, atol=2e-2)
    np.testing.assert_allclose(np.asarray(hx_final[1]), np.asarray(rcf), rtol=2e-2, atol=2e-2)
    np.testing.assert_allclose(np.asarray(outputh[0]), np.asarray(rh[0]), rtol=2e-2, atol=2e-2)
    np.testing.assert_allclose(np.asarray(outputc[-1]), np.asarray(rc[-1]), rtol=2e-2, atol=2e-2)

    print("KERNEL_OK")
</pallas_src>

<mosaic_0001>
module attributes {stable_mosaic.version = 11 : i64} {
  func.func @_tplstm_seq_kernel(%arg0: i32, %arg1: memref<8x4x128xf32, #tpu.memory_space<vmem>>, %arg2: memref<8x4x1xf32, #tpu.memory_space<vmem>>, %arg3: memref<32x128xf32, #tpu.memory_space<vmem>>, %arg4: memref<32x32xf32, #tpu.memory_space<vmem>>, %arg5: memref<1x32xf32, #tpu.memory_space<vmem>>, %arg6: memref<4x32xf32, #tpu.memory_space<vmem>>, %arg7: memref<4x32xf32, #tpu.memory_space<vmem>>, %arg8: memref<8x4x32xf32, #tpu.memory_space<vmem>>, %arg9: memref<8x4x32xf32, #tpu.memory_space<vmem>>) attributes {dimension_semantics = [#tpu.dimension_semantics<arbitrary>], iteration_bounds = array<i64: 1>, scalar_prefetch = 0 : i64, scratch_operands = 0 : i64, tpu.core_type = #tpu.core_type<tc>, window_params = [{pipeline_mode = #tpu.pipeline_mode<synchronous>, transform_indices = @transform_0, window_bounds = array<i64: 8, 4, 128>}, {pipeline_mode = #tpu.pipeline_mode<synchronous>, transform_indices = @transform_1, window_bounds = array<i64: 8, 4, 1>}, {pipeline_mode = #tpu.pipeline_mode<synchronous>, transform_indices = @transform_2, window_bounds = array<i64: 32, 128>}, {pipeline_mode = #tpu.pipeline_mode<synchronous>, transform_indices = @transform_3, window_bounds = array<i64: 32, 32>}, {pipeline_mode = #tpu.pipeline_mode<synchronous>, transform_indices = @transform_4, window_bounds = array<i64: 1, 32>}, {pipeline_mode = #tpu.pipeline_mode<synchronous>, transform_indices = @transform_5, window_bounds = array<i64: 4, 32>}, {pipeline_mode = #tpu.pipeline_mode<synchronous>, transform_indices = @transform_6, window_bounds = array<i64: 4, 32>}, {pipeline_mode = #tpu.pipeline_mode<synchronous>, transform_indices = @transform_7, window_bounds = array<i64: 8, 4, 32>}, {pipeline_mode = #tpu.pipeline_mode<synchronous>, transform_indices = @transform_8, window_bounds = array<i64: 8, 4, 32>}]} {
    %c0 = arith.constant 0 : index
    %c0_0 = arith.constant 0 : index
    %0 = vector.load %arg3[%c0, %c0_0] : memref<32x128xf32, #tpu.memory_space<vmem>>, vector<32x128xf32>
    %c0_1 = arith.constant 0 : index
    %c0_2 = arith.constant 0 : index
    %1 = vector.load %arg4[%c0_1, %c0_2] : memref<32x32xf32, #tpu.memory_space<vmem>>, vector<32x32xf32>
    %c0_3 = arith.constant 0 : index
    %c0_4 = arith.constant 0 : index
    %2 = vector.load %arg5[%c0_3, %c0_4] : memref<1x32xf32, #tpu.memory_space<vmem>>, vector<1x32xf32>
    %c0_5 = arith.constant 0 : index
    %c0_6 = arith.constant 0 : index
    %3 = vector.load %arg6[%c0_5, %c0_6] : memref<4x32xf32, #tpu.memory_space<vmem>>, vector<4x32xf32>
    %c0_7 = arith.constant 0 : index
    %c0_8 = arith.constant 0 : index
    %4 = vector.load %arg7[%c0_7, %c0_8] : memref<4x32xf32, #tpu.memory_space<vmem>>, vector<4x32xf32>
    %c0_i32 = arith.constant 0 : i32
    %cst = arith.constant dense<0.000000e+00> : vector<4x32xf32>
    %5 = tpu.matmul %4, %1, %cst {dimension_numbers = #tpu.dot_dimension_numbers<[1], [0], [0], [1], [0, 0, 1, 1], [], []>} : vector<4x32xf32>, vector<32x32xf32>, vector<4x32xf32> -> vector<4x32xf32>
    %6 = vector.broadcast %2 : vector<1x32xf32> to vector<4x32xf32>
    %7 = arith.addf %5, %6 : vector<4x32xf32>
    %8 = math.tanh %7 : vector<4x32xf32>
    %9 = arith.subf %4, %8 : vector<4x32xf32>
    %10 = arith.index_cast %c0_i32 : i32 to index
    %c0_9 = arith.constant 0 : index
    %c0_10 = arith.constant 0 : index
    %11 = vector.load %arg2[%10, %c0_9, %c0_10] : memref<8x4x1xf32, #tpu.memory_space<vmem>>, vector<1x4x1xf32>
    %12 = vector.shape_cast %11 : vector<1x4x1xf32> to vector<4x1xf32>
    %13 = vector.broadcast %12 : vector<4x1xf32> to vector<4x32xf32>
    %14 = arith.mulf %13, %8 : vector<4x32xf32>
    %15 = arith.addf %9, %14 : vector<4x32xf32>
    %16 = arith.index_cast %c0_i32 : i32 to index
    %c0_11 = arith.constant 0 : index
    %c0_12 = arith.constant 0 : index
    %17 = vector.load %arg1[%16, %c0_11, %c0_12] : memref<8x4x128xf32, #tpu.memory_space<vmem>>, vector<1x4x128xf32>
    %18 = vector.shape_cast %17 : vector<1x4x128xf32> to vector<4x128xf32>
    %cst_13 = arith.constant dense<0.000000e+00> : vector<4x128xf32>
    %19 = tpu.matmul %3, %0, %cst_13 {dimension_numbers = #tpu.dot_dimension_numbers<[1], [0], [0], [1], [0, 0, 1, 1], [], []>} : vector<4x32xf32>, vector<32x128xf32>, vector<4x128xf32> -> vector<4x128xf32>
    %20 = arith.addf %18, %19 : vector<4x128xf32>
    %21 = vector.extract_strided_slice %20 {offsets = [0, 0], sizes = [4, 32], strides = [1, 1]} : vector<4x128xf32> to vector<4x32xf32>
    %22 = arith.negf %21 : vector<4x32xf32>
    %23 = math.exp %22 : vector<4x32xf32>
    %cst_14 = arith.constant 1.000000e+00 : f32
    %24 = vector.broadcast %cst_14 : f32 to vector<4x32xf32>
    %25 = arith.addf %24, %23 : vector<4x32xf32>
    %26 = arith.divf %24, %25 : vector<4x32xf32>
    %27 = vector.extract_strided_slice %20 {offsets = [0, 32], sizes = [4, 32], strides = [1, 1]} : vector<4x128xf32> to vector<4x32xf32>
    %28 = arith.negf %27 : vector<4x32xf32>
    %29 = math.exp %28 : vector<4x32xf32>
    %cst_15 = arith.constant 1.000000e+00 : f32
    %30 = vector.broadcast %cst_15 : f32 to vector<4x32xf32>
    %31 = arith.addf %30, %29 : vector<4x32xf32>
    %32 = arith.divf %30, %31 : vector<4x32xf32>
    %33 = vector.extract_strided_slice %20 {offsets = [0, 64], sizes = [4, 32], strides = [1, 1]} : vector<4x128xf32> to vector<4x32xf32>
    %34 = math.tanh %33 : vector<4x32xf32>
    %35 = vector.extract_strided_slice %20 {offsets = [0, 96], sizes = [4, 32], strides = [1, 1]} : vector<4x128xf32> to vector<4x32xf32>
    %36 = arith.negf %35 : vector<4x32xf32>
    %37 = math.exp %36 : vector<4x32xf32>
    %cst_16 = arith.constant 1.000000e+00 : f32
    %38 = vector.broadcast %cst_16 : f32 to vector<4x32xf32>
    %39 = arith.addf %38, %37 : vector<4x32xf32>
    %40 = arith.divf %38, %39 : vector<4x32xf32>
    %41 = arith.mulf %32, %15 : vector<4x32xf32>
    %42 = arith.mulf %26, %34 : vector<4x32xf32>
    %43 = arith.addf %41, %42 : vector<4x32xf32>
    %44 = math.tanh %43 : vector<4x32xf32>
    %45 = arith.mulf %40, %44 : vector<4x32xf32>
    %46 = arith.index_cast %c0_i32 : i32 to index
    %c0_17 = arith.constant 0 : index
    %c0_18 = arith.constant 0 : index
    %47 = vector.load %arg8[%46, %c0_17, %c0_18] : memref<8x4x32xf32, #tpu.memory_space<vmem>>, vector<1x4x32xf32>
    %48 = vector.shape_cast %47 : vector<1x4x32xf32> to vector<4x32xf32>
    %49 = vector.shape_cast %45 : vector<4x32xf32> to vector<1x4x32xf32>
    tpu.vector_store %arg8[%46, %c0_17, %c0_18], %49 {strides = array<i32>} : memref<8x4x32xf32, #tpu.memory_space<vmem>>, vector<1x4x32xf32>,
    %50 = arith.index_cast %c0_i32 : i32 to index
    %c0_19 = arith.constant 0 : index
    %c0_20 = arith.constant 0 : index
    %51 = vector.load %arg9[%50, %c0_19, %c0_20] : memref<8x4x32xf32, #tpu.memory_space<vmem>>, vector<1x4x32xf32>
    %52 = vector.shape_cast %51 : vector<1x4x32xf32> to vector<4x32xf32>
    %53 = vector.shape_cast %43 : vector<4x32xf32> to vector<1x4x32xf32>
    tpu.vector_store %arg9[%50, %c0_19, %c0_20], %53 {strides = array<i32>} : memref<8x4x32xf32, #tpu.memory_space<vmem>>, vector<1x4x32xf32>,
    %c1_i32 = arith.constant 1 : i32
    %cst_21 = arith.constant dense<0.000000e+00> : vector<4x32xf32>
    %54 = tpu.matmul %43, %1, %cst_21 {dimension_numbers = #tpu.dot_dimension_numbers<[1], [0], [0], [1], [0, 0, 1, 1], [], []>} : vector<4x32xf32>, vector<32x32xf32>, vector<4x32xf32> -> vector<4x32xf32>
    %55 = vector.broadcast %2 : vector<1x32xf32> to vector<4x32xf32>
    %56 = arith.addf %54, %55 : vector<4x32xf32>
    %57 = math.tanh %56 : vector<4x32xf32>
    %58 = arith.subf %43, %57 : vector<4x32xf32>
    %59 = arith.index_cast %c1_i32 : i32 to index
    %c0_22 = arith.constant 0 : index
    %c0_23 = arith.constant 0 : index
    %60 = vector.load %arg2[%59, %c0_22, %c0_23] : memref<8x4x1xf32, #tpu.memory_space<vmem>>, vector<1x4x1xf32>
    %61 = vector.shape_cast %60 : vector<1x4x1xf32> to vector<4x1xf32>
    %62 = vector.broadcast %61 : vector<4x1xf32> to vector<4x32xf32>
    %63 = arith.mulf %62, %57 : vector<4x32xf32>
    %64 = arith.addf %58, %63 : vector<4x32xf32>
    %65 = arith.index_cast %c1_i32 : i32 to index
    %c0_24 = arith.constant 0 : index
    %c0_25 = arith.constant 0 : index
    %66 = vector.load %arg1[%65, %c0_24, %c0_25] : memref<8x4x128xf32, #tpu.memory_space<vmem>>, vector<1x4x128xf32>
    %67 = vector.shape_cast %66 : vector<1x4x128xf32> to vector<4x128xf32>
    %cst_26 = arith.constant dense<0.000000e+00> : vector<4x128xf32>
    %68 = tpu.matmul %45, %0, %cst_26 {dimension_numbers = #tpu.dot_dimension_numbers<[1], [0], [0], [1], [0, 0, 1, 1], [], []>} : vector<4x32xf32>, vector<32x128xf32>, vector<4x128xf32> -> vector<4x128xf32>
    %69 = arith.addf %67, %68 : vector<4x128xf32>
    %70 = vector.extract_strided_slice %69 {offsets = [0, 0], sizes = [4, 32], strides = [1, 1]} : vector<4x128xf32> to vector<4x32xf32>
    %71 = arith.negf %70 : vector<4x32xf32>
    %72 = math.exp %71 : vector<4x32xf32>
    %cst_27 = arith.constant 1.000000e+00 : f32
    %73 = vector.broadcast %cst_27 : f32 to vector<4x32xf32>
    %74 = arith.addf %73, %72 : vector<4x32xf32>
    %75 = arith.divf %73, %74 : vector<4x32xf32>
    %76 = vector.extract_strided_slice %69 {offsets = [0, 32], sizes = [4, 32], strides = [1, 1]} : vector<4x128xf32> to vector<4x32xf32>
    %77 = arith.negf %76 : vector<4x32xf32>
    %78 = math.exp %77 : vector<4x32xf32>
    %cst_28 = arith.constant 1.000000e+00 : f32
    %79 = vector.broadcast %cst_28 : f32 to vector<4x32xf32>
    %80 = arith.addf %79, %78 : vector<4x32xf32>
    %81 = arith.divf %79, %80 : vector<4x32xf32>
    %82 = vector.extract_strided_slice %69 {offsets = [0, 64], sizes = [4, 32], strides = [1, 1]} : vector<4x128xf32> to vector<4x32xf32>
    %83 = math.tanh %82 : vector<4x32xf32>
    %84 = vector.extract_strided_slice %69 {offsets = [0, 96], sizes = [4, 32], strides = [1, 1]} : vector<4x128xf32> to vector<4x32xf32>
    %85 = arith.negf %84 : vector<4x32xf32>
    %86 = math.exp %85 : vector<4x32xf32>
    %cst_29 = arith.constant 1.000000e+00 : f32
    %87 = vector.broadcast %cst_29 : f32 to vector<4x32xf32>
    %88 = arith.addf %87, %86 : vector<4x32xf32>
    %89 = arith.divf %87, %88 : vector<4x32xf32>
    %90 = arith.mulf %81, %64 : vector<4x32xf32>
    %91 = arith.mulf %75, %83 : vector<4x32xf32>
    %92 = arith.addf %90, %91 : vector<4x32xf32>
    %93 = math.tanh %92 : vector<4x32xf32>
    %94 = arith.mulf %89, %93 : vector<4x32xf32>
    %95 = arith.index_cast %c1_i32 : i32 to index
    %c0_30 = arith.constant 0 : index
    %c0_31 = arith.constant 0 : index
    %96 = vector.load %arg8[%95, %c0_30, %c0_31] : memref<8x4x32xf32, #tpu.memory_space<vmem>>, vector<1x4x32xf32>
    %97 = vector.shape_cast %96 : vector<1x4x32xf32> to vector<4x32xf32>
    %98 = vector.shape_cast %94 : vector<4x32xf32> to vector<1x4x32xf32>
    tpu.vector_store %arg8[%95, %c0_30, %c0_31], %98 {strides = array<i32>} : memref<8x4x32xf32, #tpu.memory_space<vmem>>, vector<1x4x32xf32>,
    %99 = arith.index_cast %c1_i32 : i32 to index
    %c0_32 = arith.constant 0 : index
    %c0_33 = arith.constant 0 : index
    %100 = vector.load %arg9[%99, %c0_32, %c0_33] : memref<8x4x32xf32, #tpu.memory_space<vmem>>, vector<1x4x32xf32>
    %101 = vector.shape_cast %100 : vector<1x4x32xf32> to vector<4x32xf32>
    %102 = vector.shape_cast %92 : vector<4x32xf32> to vector<1x4x32xf32>
    tpu.vector_store %arg9[%99, %c0_32, %c0_33], %102 {strides = array<i32>} : memref<8x4x32xf32, #tpu.memory_space<vmem>>, vector<1x4x32xf32>,
    %c2_i32 = arith.constant 2 : i32
    %cst_34 = arith.constant dense<0.000000e+00> : vector<4x32xf32>
    %103 = tpu.matmul %92, %1, %cst_34 {dimension_numbers = #tpu.dot_dimension_numbers<[1], [0], [0], [1], [0, 0, 1, 1], [], []>} : vector<4x32xf32>, vector<32x32xf32>, vector<4x32xf32> -> vector<4x32xf32>
    %104 = vector.broadcast %2 : vector<1x32xf32> to vector<4x32xf32>
    %105 = arith.addf %103, %104 : vector<4x32xf32>
    %106 = math.tanh %105 : vector<4x32xf32>
    %107 = arith.subf %92, %106 : vector<4x32xf32>
    %108 = arith.index_cast %c2_i32 : i32 to index
    %c0_35 = arith.constant 0 : index
    %c0_36 = arith.constant 0 : index
    %109 = vector.load %arg2[%108, %c0_35, %c0_36] : memref<8x4x1xf32, #tpu.memory_space<vmem>>, vector<1x4x1xf32>
    %110 = vector.shape_cast %109 : vector<1x4x1xf32> to vector<4x1xf32>
    %111 = vector.broadcast %110 : vector<4x1xf32> to vector<4x32xf32>
    %112 = arith.mulf %111, %106 : vector<4x32xf32>
    %113 = arith.addf %107, %112 : vector<4x32xf32>
    %114 = arith.index_cast %c2_i32 : i32 to index
    %c0_37 = arith.constant 0 : index
    %c0_38 = arith.constant 0 : index
    %115 = vector.load %arg1[%114, %c0_37, %c0_38] : memref<8x4x128xf32, #tpu.memory_space<vmem>>, vector<1x4x128xf32>
    %116 = vector.shape_cast %115 : vector<1x4x128xf32> to vector<4x128xf32>
    %cst_39 = arith.constant dense<0.000000e+00> : vector<4x128xf32>
    %117 = tpu.matmul %94, %0, %cst_39 {dimension_numbers = #tpu.dot_dimension_numbers<[1], [0], [0], [1], [0, 0, 1, 1], [], []>} : vector<4x32xf32>, vector<32x128xf32>, vector<4x128xf32> -> vector<4x128xf32>
    %118 = arith.addf %116, %117 : vector<4x128xf32>
    %119 = vector.extract_strided_slice %118 {offsets = [0, 0], sizes = [4, 32], strides = [1, 1]} : vector<4x128xf32> to vector<4x32xf32>
    %120 = arith.negf %119 : vector<4x32xf32>
    %121 = math.exp %120 : vector<4x32xf32>
    %cst_40 = arith.constant 1.000000e+00 : f32
    %122 = vector.broadcast %cst_40 : f32 to vector<4x32xf32>
    %123 = arith.addf %122, %121 : vector<4x32xf32>
    %124 = arith.divf %122, %123 : vector<4x32xf32>
    %125 = vector.extract_strided_slice %118 {offsets = [0, 32], sizes = [4, 32], strides = [1, 1]} : vector<4x128xf32> to vector<4x32xf32>
    %126 = arith.negf %125 : vector<4x32xf32>
    %127 = math.exp %126 : vector<4x32xf32>
    %cst_41 = arith.constant 1.000000e+00 : f32
    %128 = vector.broadcast %cst_41 : f32 to vector<4x32xf32>
    %129 = arith.addf %128, %127 : vector<4x32xf32>
    %130 = arith.divf %128, %129 : vector<4x32xf32>
    %131 = vector.extract_strided_slice %118 {offsets = [0, 64], sizes = [4, 32], strides = [1, 1]} : vector<4x128xf32> to vector<4x32xf32>
    %132 = math.tanh %131 : vector<4x32xf32>
    %133 = vector.extract_strided_slice %118 {offsets = [0, 96], sizes = [4, 32], strides = [1, 1]} : vector<4x128xf32> to vector<4x32xf32>
    %134 = arith.negf %133 : vector<4x32xf32>
    %135 = math.exp %134 : vector<4x32xf32>
    %cst_42 = arith.constant 1.000000e+00 : f32
    %136 = vector.broadcast %cst_42 : f32 to vector<4x32xf32>
    %137 = arith.addf %136, %135 : vector<4x32xf32>
    %138 = arith.divf %136, %137 : vector<4x32xf32>
    %139 = arith.mulf %130, %113 : vector<4x32xf32>
    %140 = arith.mulf %124, %132 : vector<4x32xf32>
    %141 = arith.addf %139, %140 : vector<4x32xf32>
    %142 = math.tanh %141 : vector<4x32xf32>
    %143 = arith.mulf %138, %142 : vector<4x32xf32>
    %144 = arith.index_cast %c2_i32 : i32 to index
    %c0_43 = arith.constant 0 : index
    %c0_44 = arith.constant 0 : index
    %145 = vector.load %arg8[%144, %c0_43, %c0_44] : memref<8x4x32xf32, #tpu.memory_space<vmem>>, vector<1x4x32xf32>
    %146 = vector.shape_cast %145 : vector<1x4x32xf32> to vector<4x32xf32>
    %147 = vector.shape_cast %143 : vector<4x32xf32> to vector<1x4x32xf32>
    tpu.vector_store %arg8[%144, %c0_43, %c0_44], %147 {strides = array<i32>} : memref<8x4x32xf32, #tpu.memory_space<vmem>>, vector<1x4x32xf32>,
    %148 = arith.index_cast %c2_i32 : i32 to index
    %c0_45 = arith.constant 0 : index
    %c0_46 = arith.constant 0 : index
    %149 = vector.load %arg9[%148, %c0_45, %c0_46] : memref<8x4x32xf32, #tpu.memory_space<vmem>>, vector<1x4x32xf32>
    %150 = vector.shape_cast %149 : vector<1x4x32xf32> to vector<4x32xf32>
    %151 = vector.shape_cast %141 : vector<4x32xf32> to vector<1x4x32xf32>
    tpu.vector_store %arg9[%148, %c0_45, %c0_46], %151 {strides = array<i32>} : memref<8x4x32xf32, #tpu.memory_space<vmem>>, vector<1x4x32xf32>,
    %c3_i32 = arith.constant 3 : i32
    %cst_47 = arith.constant dense<0.000000e+00> : vector<4x32xf32>
    %152 = tpu.matmul %141, %1, %cst_47 {dimension_numbers = #tpu.dot_dimension_numbers<[1], [0], [0], [1], [0, 0, 1, 1], [], []>} : vector<4x32xf32>, vector<32x32xf32>, vector<4x32xf32> -> vector<4x32xf32>
    %153 = vector.broadcast %2 : vector<1x32xf32> to vector<4x32xf32>
    %154 = arith.addf %152, %153 : vector<4x32xf32>
    %155 = math.tanh %154 : vector<4x32xf32>
    %156 = arith.subf %141, %155 : vector<4x32xf32>
    %157 = arith.index_cast %c3_i32 : i32 to index
    %c0_48 = arith.constant 0 : index
    %c0_49 = arith.constant 0 : index
    %158 = vector.load %arg2[%157, %c0_48, %c0_49] : memref<8x4x1xf32, #tpu.memory_space<vmem>>, vector<1x4x1xf32>
    %159 = vector.shape_cast %158 : vector<1x4x1xf32> to vector<4x1xf32>
    %160 = vector.broadcast %159 : vector<4x1xf32> to vector<4x32xf32>
    %161 = arith.mulf %160, %155 : vector<4x32xf32>
    %162 = arith.addf %156, %161 : vector<4x32xf32>
    %163 = arith.index_cast %c3_i32 : i32 to index
    %c0_50 = arith.constant 0 : index
    %c0_51 = arith.constant 0 : index
    %164 = vector.load %arg1[%163, %c0_50, %c0_51] : memref<8x4x128xf32, #tpu.memory_space<vmem>>, vector<1x4x128xf32>
    %165 = vector.shape_cast %164 : vector<1x4x128xf32> to vector<4x128xf32>
    %cst_52 = arith.constant dense<0.000000e+00> : vector<4x128xf32>
    %166 = tpu.matmul %143, %0, %cst_52 {dimension_numbers = #tpu.dot_dimension_numbers<[1], [0], [0], [1], [0, 0, 1, 1], [], []>} : vector<4x32xf32>, vector<32x128xf32>, vector<4x128xf32> -> vector<4x128xf32>
    %167 = arith.addf %165, %166 : vector<4x128xf32>
    %168 = vector.extract_strided_slice %167 {offsets = [0, 0], sizes = [4, 32], strides = [1, 1]} : vector<4x128xf32> to vector<4x32xf32>
    %169 = arith.negf %168 : vector<4x32xf32>
    %170 = math.exp %169 : vector<4x32xf32>
    %cst_53 = arith.constant 1.000000e+00 : f32
    %171 = vector.broadcast %cst_53 : f32 to vector<4x32xf32>
    %172 = arith.addf %171, %170 : vector<4x32xf32>
    %173 = arith.divf %171, %172 : vector<4x32xf32>
    %174 = vector.extract_strided_slice %167 {offsets = [0, 32], sizes = [4, 32], strides = [1, 1]} : vector<4x128xf32> to vector<4x32xf32>
    %175 = arith.negf %174 : vector<4x32xf32>
    %176 = math.exp %175 : vector<4x32xf32>
    %cst_54 = arith.constant 1.000000e+00 : f32
    %177 = vector.broadcast %cst_54 : f32 to vector<4x32xf32>
    %178 = arith.addf %177, %176 : vector<4x32xf32>
    %179 = arith.divf %177, %178 : vector<4x32xf32>
    %180 = vector.extract_strided_slice %167 {offsets = [0, 64], sizes = [4, 32], strides = [1, 1]} : vector<4x128xf32> to vector<4x32xf32>
    %181 = math.tanh %180 : vector<4x32xf32>
    %182 = vector.extract_strided_slice %167 {offsets = [0, 96], sizes = [4, 32], strides = [1, 1]} : vector<4x128xf32> to vector<4x32xf32>
    %183 = arith.negf %182 : vector<4x32xf32>
    %184 = math.exp %183 : vector<4x32xf32>
    %cst_55 = arith.constant 1.000000e+00 : f32
    %185 = vector.broadcast %cst_55 : f32 to vector<4x32xf32>
    %186 = arith.addf %185, %184 : vector<4x32xf32>
    %187 = arith.divf %185, %186 : vector<4x32xf32>
    %188 = arith.mulf %179, %162 : vector<4x32xf32>
    %189 = arith.mulf %173, %181 : vector<4x32xf32>
    %190 = arith.addf %188, %189 : vector<4x32xf32>
    %191 = math.tanh %190 : vector<4x32xf32>
    %192 = arith.mulf %187, %191 : vector<4x32xf32>
    %193 = arith.index_cast %c3_i32 : i32 to index
    %c0_56 = arith.constant 0 : index
    %c0_57 = arith.constant 0 : index
    %194 = vector.load %arg8[%193, %c0_56, %c0_57] : memref<8x4x32xf32, #tpu.memory_space<vmem>>, vector<1x4x32xf32>
    %195 = vector.shape_cast %194 : vector<1x4x32xf32> to vector<4x32xf32>
    %196 = vector.shape_cast %192 : vector<4x32xf32> to vector<1x4x32xf32>
    tpu.vector_store %arg8[%193, %c0_56, %c0_57], %196 {strides = array<i32>} : memref<8x4x32xf32, #tpu.memory_space<vmem>>, vector<1x4x32xf32>,
    %197 = arith.index_cast %c3_i32 : i32 to index
    %c0_58 = arith.constant 0 : index
    %c0_59 = arith.constant 0 : index
    %198 = vector.load %arg9[%197, %c0_58, %c0_59] : memref<8x4x32xf32, #tpu.memory_space<vmem>>, vector<1x4x32xf32>
    %199 = vector.shape_cast %198 : vector<1x4x32xf32> to vector<4x32xf32>
    %200 = vector.shape_cast %190 : vector<4x32xf32> to vector<1x4x32xf32>
    tpu.vector_store %arg9[%197, %c0_58, %c0_59], %200 {strides = array<i32>} : memref<8x4x32xf32, #tpu.memory_space<vmem>>, vector<1x4x32xf32>,
    %c4_i32 = arith.constant 4 : i32
    %cst_60 = arith.constant dense<0.000000e+00> : vector<4x32xf32>
    %201 = tpu.matmul %190, %1, %cst_60 {dimension_numbers = #tpu.dot_dimension_numbers<[1], [0], [0], [1], [0, 0, 1, 1], [], []>} : vector<4x32xf32>, vector<32x32xf32>, vector<4x32xf32> -> vector<4x32xf32>
    %202 = vector.broadcast %2 : vector<1x32xf32> to vector<4x32xf32>
    %203 = arith.addf %201, %202 : vector<4x32xf32>
    %204 = math.tanh %203 : vector<4x32xf32>
    %205 = arith.subf %190, %204 : vector<4x32xf32>
    %206 = arith.index_cast %c4_i32 : i32 to index
    %c0_61 = arith.constant 0 : index
    %c0_62 = arith.constant 0 : index
    %207 = vector.load %arg2[%206, %c0_61, %c0_62] : memref<8x4x1xf32, #tpu.memory_space<vmem>>, vector<1x4x1xf32>
    %208 = vector.shape_cast %207 : vector<1x4x1xf32> to vector<4x1xf32>
    %209 = vector.broadcast %208 : vector<4x1xf32> to vector<4x32xf32>
    %210 = arith.mulf %209, %204 : vector<4x32xf32>
    %211 = arith.addf %205, %210 : vector<4x32xf32>
    %212 = arith.index_cast %c4_i32 : i32 to index
    %c0_63 = arith.constant 0 : index
    %c0_64 = arith.constant 0 : index
    %213 = vector.load %arg1[%212, %c0_63, %c0_64] : memref<8x4x128xf32, #tpu.memory_space<vmem>>, vector<1x4x128xf32>
    %214 = vector.shape_cast %213 : vector<1x4x128xf32> to vector<4x128xf32>
    %cst_65 = arith.constant dense<0.000000e+00> : vector<4x128xf32>
    %215 = tpu.matmul %192, %0, %cst_65 {dimension_numbers = #tpu.dot_dimension_numbers<[1], [0], [0], [1], [0, 0, 1, 1], [], []>} : vector<4x32xf32>, vector<32x128xf32>, vector<4x128xf32> -> vector<4x128xf32>
    %216 = arith.addf %214, %215 : vector<4x128xf32>
    %217 = vector.extract_strided_slice %216 {offsets = [0, 0], sizes = [4, 32], strides = [1, 1]} : vector<4x128xf32> to vector<4x32xf32>
    %218 = arith.negf %217 : vector<4x32xf32>
    %219 = math.exp %218 : vector<4x32xf32>
    %cst_66 = arith.constant 1.000000e+00 : f32
    %220 = vector.broadcast %cst_66 : f32 to vector<4x32xf32>
    %221 = arith.addf %220, %219 : vector<4x32xf32>
    %222 = arith.divf %220, %221 : vector<4x32xf32>
    %223 = vector.extract_strided_slice %216 {offsets = [0, 32], sizes = [4, 32], strides = [1, 1]} : vector<4x128xf32> to vector<4x32xf32>
    %224 = arith.negf %223 : vector<4x32xf32>
    %225 = math.exp %224 : vector<4x32xf32>
    %cst_67 = arith.constant 1.000000e+00 : f32
    %226 = vector.broadcast %cst_67 : f32 to vector<4x32xf32>
    %227 = arith.addf %226, %225 : vector<4x32xf32>
    %228 = arith.divf %226, %227 : vector<4x32xf32>
    %229 = vector.extract_strided_slice %216 {offsets = [0, 64], sizes = [4, 32], strides = [1, 1]} : vector<4x128xf32> to vector<4x32xf32>
    %230 = math.tanh %229 : vector<4x32xf32>
    %231 = vector.extract_strided_slice %216 {offsets = [0, 96], sizes = [4, 32], strides = [1, 1]} : vector<4x128xf32> to vector<4x32xf32>
    %232 = arith.negf %231 : vector<4x32xf32>
    %233 = math.exp %232 : vector<4x32xf32>
    %cst_68 = arith.constant 1.000000e+00 : f32
    %234 = vector.broadcast %cst_68 : f32 to vector<4x32xf32>
    %235 = arith.addf %234, %233 : vector<4x32xf32>
    %236 = arith.divf %234, %235 : vector<4x32xf32>
    %237 = arith.mulf %228, %211 : vector<4x32xf32>
    %238 = arith.mulf %222, %230 : vector<4x32xf32>
    %239 = arith.addf %237, %238 : vector<4x32xf32>
    %240 = math.tanh %239 : vector<4x32xf32>
    %241 = arith.mulf %236, %240 : vector<4x32xf32>
    %242 = arith.index_cast %c4_i32 : i32 to index
    %c0_69 = arith.constant 0 : index
    %c0_70 = arith.constant 0 : index
    %243 = vector.load %arg8[%242, %c0_69, %c0_70] : memref<8x4x32xf32, #tpu.memory_space<vmem>>, vector<1x4x32xf32>
    %244 = vector.shape_cast %243 : vector<1x4x32xf32> to vector<4x32xf32>
    %245 = vector.shape_cast %241 : vector<4x32xf32> to vector<1x4x32xf32>
    tpu.vector_store %arg8[%242, %c0_69, %c0_70], %245 {strides = array<i32>} : memref<8x4x32xf32, #tpu.memory_space<vmem>>, vector<1x4x32xf32>,
    %246 = arith.index_cast %c4_i32 : i32 to index
    %c0_71 = arith.constant 0 : index
    %c0_72 = arith.constant 0 : index
    %247 = vector.load %arg9[%246, %c0_71, %c0_72] : memref<8x4x32xf32, #tpu.memory_space<vmem>>, vector<1x4x32xf32>
    %248 = vector.shape_cast %247 : vector<1x4x32xf32> to vector<4x32xf32>
    %249 = vector.shape_cast %239 : vector<4x32xf32> to vector<1x4x32xf32>
    tpu.vector_store %arg9[%246, %c0_71, %c0_72], %249 {strides = array<i32>} : memref<8x4x32xf32, #tpu.memory_space<vmem>>, vector<1x4x32xf32>,
    %c5_i32 = arith.constant 5 : i32
    %cst_73 = arith.constant dense<0.000000e+00> : vector<4x32xf32>
    %250 = tpu.matmul %239, %1, %cst_73 {dimension_numbers = #tpu.dot_dimension_numbers<[1], [0], [0], [1], [0, 0, 1, 1], [], []>} : vector<4x32xf32>, vector<32x32xf32>, vector<4x32xf32> -> vector<4x32xf32>
    %251 = vector.broadcast %2 : vector<1x32xf32> to vector<4x32xf32>
    %252 = arith.addf %250, %251 : vector<4x32xf32>
    %253 = math.tanh %252 : vector<4x32xf32>
    %254 = arith.subf %239, %253 : vector<4x32xf32>
    %255 = arith.index_cast %c5_i32 : i32 to index
    %c0_74 = arith.constant 0 : index
    %c0_75 = arith.constant 0 : index
    %256 = vector.load %arg2[%255, %c0_74, %c0_75] : memref<8x4x1xf32, #tpu.memory_space<vmem>>, vector<1x4x1xf32>
    %257 = vector.shape_cast %256 : vector<1x4x1xf32> to vector<4x1xf32>
    %258 = vector.broadcast %257 : vector<4x1xf32> to vector<4x32xf32>
    %259 = arith.mulf %258, %253 : vector<4x32xf32>
    %260 = arith.addf %254, %259 : vector<4x32xf32>
    %261 = arith.index_cast %c5_i32 : i32 to index
    %c0_76 = arith.constant 0 : index
    %c0_77 = arith.constant 0 : index
    %262 = vector.load %arg1[%261, %c0_76, %c0_77] : memref<8x4x128xf32, #tpu.memory_space<vmem>>, vector<1x4x128xf32>
    %263 = vector.shape_cast %262 : vector<1x4x128xf32> to vector<4x128xf32>
    %cst_78 = arith.constant dense<0.000000e+00> : vector<4x128xf32>
    %264 = tpu.matmul %241, %0, %cst_78 {dimension_numbers = #tpu.dot_dimension_numbers<[1], [0], [0], [1], [0, 0, 1, 1], [], []>} : vector<4x32xf32>, vector<32x128xf32>, vector<4x128xf32> -> vector<4x128xf32>
    %265 = arith.addf %263, %264 : vector<4x128xf32>
    %266 = vector.extract_strided_slice %265 {offsets = [0, 0], sizes = [4, 32], strides = [1, 1]} : vector<4x128xf32> to vector<4x32xf32>
    %267 = arith.negf %266 : vector<4x32xf32>
    %268 = math.exp %267 : vector<4x32xf32>
    %cst_79 = arith.constant 1.000000e+00 : f32
    %269 = vector.broadcast %cst_79 : f32 to vector<4x32xf32>
    %270 = arith.addf %269, %268 : vector<4x32xf32>
    %271 = arith.divf %269, %270 : vector<4x32xf32>
    %272 = vector.extract_strided_slice %265 {offsets = [0, 32], sizes = [4, 32], strides = [1, 1]} : vector<4x128xf32> to vector<4x32xf32>
    %273 = arith.negf %272 : vector<4x32xf32>
    %274 = math.exp %273 : vector<4x32xf32>
    %cst_80 = arith.constant 1.000000e+00 : f32
    %275 = vector.broadcast %cst_80 : f32 to vector<4x32xf32>
    %276 = arith.addf %275, %274 : vector<4x32xf32>
    %277 = arith.divf %275, %276 : vector<4x32xf32>
    %278 = vector.extract_strided_slice %265 {offsets = [0, 64], sizes = [4, 32], strides = [1, 1]} : vector<4x128xf32> to vector<4x32xf32>
    %279 = math.tanh %278 : vector<4x32xf32>
    %280 = vector.extract_strided_slice %265 {offsets = [0, 96], sizes = [4, 32], strides = [1, 1]} : vector<4x128xf32> to vector<4x32xf32>
    %281 = arith.negf %280 : vector<4x32xf32>
    %282 = math.exp %281 : vector<4x32xf32>
    %cst_81 = arith.constant 1.000000e+00 : f32
    %283 = vector.broadcast %cst_81 : f32 to vector<4x32xf32>
    %284 = arith.addf %283, %282 : vector<4x32xf32>
    %285 = arith.divf %283, %284 : vector<4x32xf32>
    %286 = arith.mulf %277, %260 : vector<4x32xf32>
    %287 = arith.mulf %271, %279 : vector<4x32xf32>
    %288 = arith.addf %286, %287 : vector<4x32xf32>
    %289 = math.tanh %288 : vector<4x32xf32>
    %290 = arith.mulf %285, %289 : vector<4x32xf32>
    %291 = arith.index_cast %c5_i32 : i32 to index
    %c0_82 = arith.constant 0 : index
    %c0_83 = arith.constant 0 : index
    %292 = vector.load %arg8[%291, %c0_82, %c0_83] : memref<8x4x32xf32, #tpu.memory_space<vmem>>, vector<1x4x32xf32>
    %293 = vector.shape_cast %292 : vector<1x4x32xf32> to vector<4x32xf32>
    %294 = vector.shape_cast %290 : vector<4x32xf32> to vector<1x4x32xf32>
    tpu.vector_store %arg8[%291, %c0_82, %c0_83], %294 {strides = array<i32>} : memref<8x4x32xf32, #tpu.memory_space<vmem>>, vector<1x4x32xf32>,
    %295 = arith.index_cast %c5_i32 : i32 to index
    %c0_84 = arith.constant 0 : index
    %c0_85 = arith.constant 0 : index
    %296 = vector.load %arg9[%295, %c0_84, %c0_85] : memref<8x4x32xf32, #tpu.memory_space<vmem>>, vector<1x4x32xf32>
    %297 = vector.shape_cast %296 : vector<1x4x32xf32> to vector<4x32xf32>
    %298 = vector.shape_cast %288 : vector<4x32xf32> to vector<1x4x32xf32>
    tpu.vector_store %arg9[%295, %c0_84, %c0_85], %298 {strides = array<i32>} : memref<8x4x32xf32, #tpu.memory_space<vmem>>, vector<1x4x32xf32>,
    %c6_i32 = arith.constant 6 : i32
    %cst_86 = arith.constant dense<0.000000e+00> : vector<4x32xf32>
    %299 = tpu.matmul %288, %1, %cst_86 {dimension_numbers = #tpu.dot_dimension_numbers<[1], [0], [0], [1], [0, 0, 1, 1], [], []>} : vector<4x32xf32>, vector<32x32xf32>, vector<4x32xf32> -> vector<4x32xf32>
    %300 = vector.broadcast %2 : vector<1x32xf32> to vector<4x32xf32>
    %301 = arith.addf %299, %300 : vector<4x32xf32>
    %302 = math.tanh %301 : vector<4x32xf32>
    %303 = arith.subf %288, %302 : vector<4x32xf32>
    %304 = arith.index_cast %c6_i32 : i32 to index
    %c0_87 = arith.constant 0 : index
    %c0_88 = arith.constant 0 : index
    %305 = vector.load %arg2[%304, %c0_87, %c0_88] : memref<8x4x1xf32, #tpu.memory_space<vmem>>, vector<1x4x1xf32>
    %306 = vector.shape_cast %305 : vector<1x4x1xf32> to vector<4x1xf32>
    %307 = vector.broadcast %306 : vector<4x1xf32> to vector<4x32xf32>
    %308 = arith.mulf %307, %302 : vector<4x32xf32>
    %309 = arith.addf %303, %308 : vector<4x32xf32>
    %310 = arith.index_cast %c6_i32 : i32 to index
    %c0_89 = arith.constant 0 : index
    %c0_90 = arith.constant 0 : index
    %311 = vector.load %arg1[%310, %c0_89, %c0_90] : memref<8x4x128xf32, #tpu.memory_space<vmem>>, vector<1x4x128xf32>
    %312 = vector.shape_cast %311 : vector<1x4x128xf32> to vector<4x128xf32>
    %cst_91 = arith.constant dense<0.000000e+00> : vector<4x128xf32>
    %313 = tpu.matmul %290, %0, %cst_91 {dimension_numbers = #tpu.dot_dimension_numbers<[1], [0], [0], [1], [0, 0, 1, 1], [], []>} : vector<4x32xf32>, vector<32x128xf32>, vector<4x128xf32> -> vector<4x128xf32>
    %314 = arith.addf %312, %313 : vector<4x128xf32>
    %315 = vector.extract_strided_slice %314 {offsets = [0, 0], sizes = [4, 32], strides = [1, 1]} : vector<4x128xf32> to vector<4x32xf32>
    %316 = arith.negf %315 : vector<4x32xf32>
    %317 = math.exp %316 : vector<4x32xf32>
    %cst_92 = arith.constant 1.000000e+00 : f32
    %318 = vector.broadcast %cst_92 : f32 to vector<4x32xf32>
    %319 = arith.addf %318, %317 : vector<4x32xf32>
    %320 = arith.divf %318, %319 : vector<4x32xf32>
    %321 = vector.extract_strided_slice %314 {offsets = [0, 32], sizes = [4, 32], strides = [1, 1]} : vector<4x128xf32> to vector<4x32xf32>
    %322 = arith.negf %321 : vector<4x32xf32>
    %323 = math.exp %322 : vector<4x32xf32>
    %cst_93 = arith.constant 1.000000e+00 : f32
    %324 = vector.broadcast %cst_93 : f32 to vector<4x32xf32>
    %325 = arith.addf %324, %323 : vector<4x32xf32>
    %326 = arith.divf %324, %325 : vector<4x32xf32>
    %327 = vector.extract_strided_slice %314 {offsets = [0, 64], sizes = [4, 32], strides = [1, 1]} : vector<4x128xf32> to vector<4x32xf32>
    %328 = math.tanh %327 : vector<4x32xf32>
    %329 = vector.extract_strided_slice %314 {offsets = [0, 96], sizes = [4, 32], strides = [1, 1]} : vector<4x128xf32> to vector<4x32xf32>
    %330 = arith.negf %329 : vector<4x32xf32>
    %331 = math.exp %330 : vector<4x32xf32>
    %cst_94 = arith.constant 1.000000e+00 : f32
    %332 = vector.broadcast %cst_94 : f32 to vector<4x32xf32>
    %333 = arith.addf %332, %331 : vector<4x32xf32>
    %334 = arith.divf %332, %333 : vector<4x32xf32>
    %335 = arith.mulf %326, %309 : vector<4x32xf32>
    %336 = arith.mulf %320, %328 : vector<4x32xf32>
    %337 = arith.addf %335, %336 : vector<4x32xf32>
    %338 = math.tanh %337 : vector<4x32xf32>
    %339 = arith.mulf %334, %338 : vector<4x32xf32>
    %340 = arith.index_cast %c6_i32 : i32 to index
    %c0_95 = arith.constant 0 : index
    %c0_96 = arith.constant 0 : index
    %341 = vector.load %arg8[%340, %c0_95, %c0_96] : memref<8x4x32xf32, #tpu.memory_space<vmem>>, vector<1x4x32xf32>
    %342 = vector.shape_cast %341 : vector<1x4x32xf32> to vector<4x32xf32>
    %343 = vector.shape_cast %339 : vector<4x32xf32> to vector<1x4x32xf32>
    tpu.vector_store %arg8[%340, %c0_95, %c0_96], %343 {strides = array<i32>} : memref<8x4x32xf32, #tpu.memory_space<vmem>>, vector<1x4x32xf32>,
    %344 = arith.index_cast %c6_i32 : i32 to index
    %c0_97 = arith.constant 0 : index
    %c0_98 = arith.constant 0 : index
    %345 = vector.load %arg9[%344, %c0_97, %c0_98] : memref<8x4x32xf32, #tpu.memory_space<vmem>>, vector<1x4x32xf32>
    %346 = vector.shape_cast %345 : vector<1x4x32xf32> to vector<4x32xf32>
    %347 = vector.shape_cast %337 : vector<4x32xf32> to vector<1x4x32xf32>
    tpu.vector_store %arg9[%344, %c0_97, %c0_98], %347 {strides = array<i32>} : memref<8x4x32xf32, #tpu.memory_space<vmem>>, vector<1x4x32xf32>,
    %c7_i32 = arith.constant 7 : i32
    %cst_99 = arith.constant dense<0.000000e+00> : vector<4x32xf32>
    %348 = tpu.matmul %337, %1, %cst_99 {dimension_numbers = #tpu.dot_dimension_numbers<[1], [0], [0], [1], [0, 0, 1, 1], [], []>} : vector<4x32xf32>, vector<32x32xf32>, vector<4x32xf32> -> vector<4x32xf32>
    %349 = vector.broadcast %2 : vector<1x32xf32> to vector<4x32xf32>
    %350 = arith.addf %348, %349 : vector<4x32xf32>
    %351 = math.tanh %350 : vector<4x32xf32>
    %352 = arith.subf %337, %351 : vector<4x32xf32>
    %353 = arith.index_cast %c7_i32 : i32 to index
    %c0_100 = arith.constant 0 : index
    %c0_101 = arith.constant 0 : index
    %354 = vector.load %arg2[%353, %c0_100, %c0_101] : memref<8x4x1xf32, #tpu.memory_space<vmem>>, vector<1x4x1xf32>
    %355 = vector.shape_cast %354 : vector<1x4x1xf32> to vector<4x1xf32>
    %356 = vector.broadcast %355 : vector<4x1xf32> to vector<4x32xf32>
    %357 = arith.mulf %356, %351 : vector<4x32xf32>
    %358 = arith.addf %352, %357 : vector<4x32xf32>
    %359 = arith.index_cast %c7_i32 : i32 to index
    %c0_102 = arith.constant 0 : index
    %c0_103 = arith.constant 0 : index
    %360 = vector.load %arg1[%359, %c0_102, %c0_103] : memref<8x4x128xf32, #tpu.memory_space<vmem>>, vector<1x4x128xf32>
    %361 = vector.shape_cast %360 : vector<1x4x128xf32> to vector<4x128xf32>
    %cst_104 = arith.constant dense<0.000000e+00> : vector<4x128xf32>
    %362 = tpu.matmul %339, %0, %cst_104 {dimension_numbers = #tpu.dot_dimension_numbers<[1], [0], [0], [1], [0, 0, 1, 1], [], []>} : vector<4x32xf32>, vector<32x128xf32>, vector<4x128xf32> -> vector<4x128xf32>
    %363 = arith.addf %361, %362 : vector<4x128xf32>
    %364 = vector.extract_strided_slice %363 {offsets = [0, 0], sizes = [4, 32], strides = [1, 1]} : vector<4x128xf32> to vector<4x32xf32>
    %365 = arith.negf %364 : vector<4x32xf32>
    %366 = math.exp %365 : vector<4x32xf32>
    %cst_105 = arith.constant 1.000000e+00 : f32
    %367 = vector.broadcast %cst_105 : f32 to vector<4x32xf32>
    %368 = arith.addf %367, %366 : vector<4x32xf32>
    %369 = arith.divf %367, %368 : vector<4x32xf32>
    %370 = vector.extract_strided_slice %363 {offsets = [0, 32], sizes = [4, 32], strides = [1, 1]} : vector<4x128xf32> to vector<4x32xf32>
    %371 = arith.negf %370 : vector<4x32xf32>
    %372 = math.exp %371 : vector<4x32xf32>
    %cst_106 = arith.constant 1.000000e+00 : f32
    %373 = vector.broadcast %cst_106 : f32 to vector<4x32xf32>
    %374 = arith.addf %373, %372 : vector<4x32xf32>
    %375 = arith.divf %373, %374 : vector<4x32xf32>
    %376 = vector.extract_strided_slice %363 {offsets = [0, 64], sizes = [4, 32], strides = [1, 1]} : vector<4x128xf32> to vector<4x32xf32>
    %377 = math.tanh %376 : vector<4x32xf32>
    %378 = vector.extract_strided_slice %363 {offsets = [0, 96], sizes = [4, 32], strides = [1, 1]} : vector<4x128xf32> to vector<4x32xf32>
    %379 = arith.negf %378 : vector<4x32xf32>
    %380 = math.exp %379 : vector<4x32xf32>
    %cst_107 = arith.constant 1.000000e+00 : f32
    %381 = vector.broadcast %cst_107 : f32 to vector<4x32xf32>
    %382 = arith.addf %381, %380 : vector<4x32xf32>
    %383 = arith.divf %381, %382 : vector<4x32xf32>
    %384 = arith.mulf %375, %358 : vector<4x32xf32>
    %385 = arith.mulf %369, %377 : vector<4x32xf32>
    %386 = arith.addf %384, %385 : vector<4x32xf32>
    %387 = math.tanh %386 : vector<4x32xf32>
    %388 = arith.mulf %383, %387 : vector<4x32xf32>
    %389 = arith.index_cast %c7_i32 : i32 to index
    %c0_108 = arith.constant 0 : index
    %c0_109 = arith.constant 0 : index
    %390 = vector.load %arg8[%389, %c0_108, %c0_109] : memref<8x4x32xf32, #tpu.memory_space<vmem>>, vector<1x4x32xf32>
    %391 = vector.shape_cast %390 : vector<1x4x32xf32> to vector<4x32xf32>
    %392 = vector.shape_cast %388 : vector<4x32xf32> to vector<1x4x32xf32>
    tpu.vector_store %arg8[%389, %c0_108, %c0_109], %392 {strides = array<i32>} : memref<8x4x32xf32, #tpu.memory_space<vmem>>, vector<1x4x32xf32>,
    %393 = arith.index_cast %c7_i32 : i32 to index
    %c0_110 = arith.constant 0 : index
    %c0_111 = arith.constant 0 : index
    %394 = vector.load %arg9[%393, %c0_110, %c0_111] : memref<8x4x32xf32, #tpu.memory_space<vmem>>, vector<1x4x32xf32>
    %395 = vector.shape_cast %394 : vector<1x4x32xf32> to vector<4x32xf32>
    %396 = vector.shape_cast %386 : vector<4x32xf32> to vector<1x4x32xf32>
    tpu.vector_store %arg9[%393, %c0_110, %c0_111], %396 {strides = array<i32>} : memref<8x4x32xf32, #tpu.memory_space<vmem>>, vector<1x4x32xf32>,
    %c8_i32 = arith.constant 8 : i32
    return
  }
  func.func @transform_0(%arg0: i32) -> (i32, i32, i32) {
    %c0_i32 = arith.constant 0 : i32
    %c0_i32_0 = arith.constant 0 : i32
    %c0_i32_1 = arith.constant 0 : i32
    %c0_i32_2 = arith.constant 0 : i32
    return %c0_i32, %c0_i32_0, %c0_i32_1 : i32, i32, i32
  }
  func.func @transform_1(%arg0: i32) -> (i32, i32, i32) {
    %c0_i32 = arith.constant 0 : i32
    %c0_i32_0 = arith.constant 0 : i32
    %c0_i32_1 = arith.constant 0 : i32
    %c0_i32_2 = arith.constant 0 : i32
    return %c0_i32, %c0_i32_0, %c0_i32_1 : i32, i32, i32
  }
  func.func @transform_2(%arg0: i32) -> (i32, i32) {
    %c0_i32 = arith.constant 0 : i32
    %c0_i32_0 = arith.constant 0 : i32
    %c0_i32_1 = arith.constant 0 : i32
    return %c0_i32, %c0_i32_0 : i32, i32
  }
  func.func @transform_3(%arg0: i32) -> (i32, i32) {
    %c0_i32 = arith.constant 0 : i32
    %c0_i32_0 = arith.constant 0 : i32
    %c0_i32_1 = arith.constant 0 : i32
    return %c0_i32, %c0_i32_0 : i32, i32
  }
  func.func @transform_4(%arg0: i32) -> (i32, i32) {
    %c0_i32 = arith.constant 0 : i32
    %c0_i32_0 = arith.constant 0 : i32
    %c0_i32_1 = arith.constant 0 : i32
    return %c0_i32, %c0_i32_0 : i32, i32
  }
  func.func @transform_5(%arg0: i32) -> (i32, i32) {
    %c0_i32 = arith.constant 0 : i32
    %c0_i32_0 = arith.constant 0 : i32
    %c0_i32_1 = arith.constant 0 : i32
    return %c0_i32, %c0_i32_0 : i32, i32
  }
  func.func @transform_6(%arg0: i32) -> (i32, i32) {
    %c0_i32 = arith.constant 0 : i32
    %c0_i32_0 = arith.constant 0 : i32
    %c0_i32_1 = arith.constant 0 : i32
    return %c0_i32, %c0_i32_0 : i32, i32
  }
  func.func @transform_7(%arg0: i32) -> (i32, i32, i32) {
    %c0_i32 = arith.constant 0 : i32
    %c0_i32_0 = arith.constant 0 : i32
    %c0_i32_1 = arith.constant 0 : i32
    %c0_i32_2 = arith.constant 0 : i32
    return %c0_i32, %c0_i32_0, %c0_i32_1 : i32, i32, i32
  }
  func.func @transform_8(%arg0: i32) -> (i32, i32, i32) {
    %c0_i32 = arith.constant 0 : i32
    %c0_i32_0 = arith.constant 0 : i32
    %c0_i32_1 = arith.constant 0 : i32
    %c0_i32_2 = arith.constant 0 : i32
    return %c0_i32, %c0_i32_0, %c0_i32_1 : i32, i32, i32
  }
}

</mosaic_0001>

<llo_original>
// kernel: tpu_custom_call.1
$region0: #{tpu_custom_call.1}
  #allocation0 [shape = 'u32[]', space=smem, size = 0x4, offset = 0x4, fixed_abs, tag = 'smem constant byte address 0x4 - core index']
  #allocation1 [shape = 'u32[144,128]{1,0:T(1,128)}', space=vmem, size = 0x12000, scoped, tag = 'internal scratch']
  %s0 = inlined_call_operand.vmem [shape: f32[8,4,128], index: 0, kind: input, shape index: {}]
  %s1 = inlined_call_operand.vmem [shape: f32[8,4,1], index: 1, kind: input, shape index: {}]
  %s2 = inlined_call_operand.hbm [shape: f32[32,128], index: 2, kind: input, shape index: {}]
  %s3 = inlined_call_operand.hbm [shape: f32[32,32], index: 3, kind: input, shape index: {}]
  %s4 = inlined_call_operand.vmem [shape: f32[1,32], index: 4, kind: input, shape index: {}]
  %s5 = inlined_call_operand.vmem [shape: f32[4,32], index: 5, kind: input, shape index: {}]
  %s6 = inlined_call_operand.vmem [shape: f32[4,32], index: 6, kind: input, shape index: {}]
  %s7 = inlined_call_operand.hbm [shape: f32[8,4,32], index: 7, kind: output, shape index: {0}]
  %s8 = inlined_call_operand.hbm [shape: f32[8,4,32], index: 8, kind: output, shape index: {1}]
  %9 = xla_tuple %s7, %s8
  %s10 = sld [smem:[#allocation0]]
  $region54: #{tpu_custom_call.1} parent=0
    _
  %s12 = ssub.s32 1, %s10
  %s13 = scalar_select 0, %s12, %s10
  $region1: #{tpu_custom_call.1} parent=0
    #allocation2 [shape = 'u8[16384]{0}', space=vmem, size = 0x4000, scoped, tag = 'input window, operand 2, single buffered']
    #allocation3 [shape = 's32[1]{0}', space=sflag, size = 0x4, scoped, tag = 'scoped memory for tpu_custom_call.1']
    #allocation4 [shape = 's32[1]{0}', space=sflag, size = 0x4, scoped, tag = 'scoped memory for tpu_custom_call.1']
    #allocation5 [shape = 'u8[16384]{0}', space=vmem, size = 0x4000, scoped, tag = 'input window, operand 3, single buffered']
    #allocation6 [shape = 's32[1]{0}', space=sflag, size = 0x4, scoped, tag = 'scoped memory for tpu_custom_call.1']
    #allocation7 [shape = 'u8[16384]{0}', space=vmem, size = 0x4000, scoped, tag = 'output window, operand 0, single buffered']
    #allocation8 [shape = 'u8[16384]{0}', space=vmem, size = 0x4000, scoped, tag = 'output window, operand 1, single buffered']
    #allocation9 [shape = 's32[1]{0}', space=sflag, size = 0x4, scoped, tag = 'scoped memory for tpu_custom_call.1']
    %14 = vsyncpa [#allocation3], 0
    %15 = vsyncpa [#allocation6], 0
    %16 = vsyncpa [#allocation4], 0
    %17 = vsyncpa [#allocation9], 0
    // Predicated region
    $region2: #{tpu_custom_call.1} parent=1 // pred_check
      _
    $region3: #{tpu_custom_call.1} parent=1 // pred_check_branch
      %19 = sbr.rel (0) target = $region5
    $region4: #{tpu_custom_call.1} parent=1 // pred_region
      _
    $region5: #{tpu_custom_call.1} parent=1 // pred_fallthru
      _
    // Predicated region
    $region6: #{tpu_custom_call.1} parent=1 // pred_check
      _
    $region7: #{tpu_custom_call.1} parent=1 // pred_check_branch
      %21 = sbr.rel (0) target = $region9
    $region8: #{tpu_custom_call.1} parent=1 // pred_region
      _
    $region9: #{tpu_custom_call.1} parent=1 // pred_fallthru
      _
    // Predicated region
    $region10: #{tpu_custom_call.1} parent=1 // pred_check
      _
    $region11: #{tpu_custom_call.1} parent=1 // pred_check_branch
      %23 = sbr.rel (0) target = $region13
    $region12: #{tpu_custom_call.1} parent=1 // pred_region
      %s25 = ssub.s32 512, 512
      %26 = vsyncadd [#allocation3], %s25
      %s27 = sshll.u32 [#allocation2], 4
      %s28 = int_to_ptr.vmem [resolvable:$true] %s27
      %33 = dma.hbm_to_vmem [thread:$0]  %s2, 512, %s28, [#allocation3], 128, 128, 8
    $region13: #{tpu_custom_call.1} parent=1 // pred_fallthru
      _
    // Predicated region
    $region14: #{tpu_custom_call.1} parent=1 // pred_check
      _
    $region15: #{tpu_custom_call.1} parent=1 // pred_check_branch
      %35 = sbr.rel (0) target = $region17
    $region16: #{tpu_custom_call.1} parent=1 // pred_region
      %s37 = ssub.s32 512, 512
      %38 = vsyncadd [#allocation6], %s37
      %s39 = sshll.u32 [#allocation5], 4
      %s40 = int_to_ptr.vmem [resolvable:$true] %s39
      %45 = dma.hbm_to_vmem [thread:$0]  %s3, 512, %s40, [#allocation6], 128, 128, 8
    $region17: #{tpu_custom_call.1} parent=1 // pred_fallthru
      _
    // Predicated region
    $region18: #{tpu_custom_call.1} parent=1 // pred_check
      _
    $region19: #{tpu_custom_call.1} parent=1 // pred_check_branch
      %47 = sbr.rel (0) target = $region21
    $region20: #{tpu_custom_call.1} parent=1 // pred_region
      _
    $region21: #{tpu_custom_call.1} parent=1 // pred_fallthru
      _
    // Predicated region
    $region22: #{tpu_custom_call.1} parent=1 // pred_check
      _
    $region23: #{tpu_custom_call.1} parent=1 // pred_check_branch
      %49 = sbr.rel (0) target = $region25
    $region24: #{tpu_custom_call.1} parent=1 // pred_region
      _
    $region25: #{tpu_custom_call.1} parent=1 // pred_fallthru
      _
    // Predicated region
    $region26: #{tpu_custom_call.1} parent=1 // pred_check
      _
    $region27: #{tpu_custom_call.1} parent=1 // pred_check_branch
      %51 = sbr.rel (0) target = $region29
    $region28: #{tpu_custom_call.1} parent=1 // pred_region
      _
    $region29: #{tpu_custom_call.1} parent=1 // pred_fallthru
      _
    // Predicated region
    $region30: #{tpu_custom_call.1} parent=1 // pred_check
      _
    $region31: #{tpu_custom_call.1} parent=1 // pred_check_branch
      %53 = sbr.rel (0) target = $region33
    $region32: #{tpu_custom_call.1} parent=1 // pred_region
      %54 = dma.done [#allocation3], 512
    $region33: #{tpu_custom_call.1} parent=1 // pred_fallthru
      _
    // Predicated region
    $region34: #{tpu_custom_call.1} parent=1 // pred_check
      _
    $region35: #{tpu_custom_call.1} parent=1 // pred_check_branch
      %56 = sbr.rel (0) target = $region37
    $region36: #{tpu_custom_call.1} parent=1 // pred_region
      %57 = dma.done [#allocation6], 512
    $region37: #{tpu_custom_call.1} parent=1 // pred_fallthru
      _
    %v58 = vld [vmem:[#allocation2] sm:$0xff]
    %v59 = vld [vmem:[#allocation2 + $0x8] sm:$0xff]
    %v60 = vld [vmem:[#allocation2 + $0x10] sm:$0xff]
    %v61 = vld [vmem:[#allocation2 + $0x18] sm:$0xff]
    %v62 = vld [vmem:[#allocation5] sm:$0xff]
    %v63 = vld [vmem:[#allocation5 + $0x8] sm:$0xff]
    %v64 = vld [vmem:[#allocation5 + $0x10] sm:$0xff]
    %v65 = vld [vmem:[#allocation5 + $0x18] sm:$0xff]
    %v66 = vld [vmem:[%s4] sm:$0x1]
    %v67 = vld [vmem:[%s5] sm:$0xf]
    %v68 = vld [vmem:[%s6] sm:$0xf]
    %v70 = vlaneseq
    %v71 = vshrl.u32 %v70, 7
    %v72 = vsub.s32 0, %v71
    %v73 = vrot.slane %v66, %v72
    %vm75 = vcmask 261120
    %v77 = vsel %vm75, %v68, 0
    %79 = vmatprep.subr.mxu0 0.0
    %80 = vmatpush1.msra.mxu0 0.0
    %81 = vmatprep.subr.mxu0 0.0
    %82 = vmatpush1.msra.mxu0 0.0
    %83 = vmatprep.subr.mxu0 0.0
    %84 = vmatpush1.msra.mxu0 0.0
    %85 = vmatprep.subr.mxu0 0.0
    %86 = vmatpush1.msra.mxu0 0.0
    %87 = vmatprep.subr.mxu0 0.0
    %88 = vmatpush1.msra.mxu0 0.0
    %89 = vmatprep.subr.mxu0 0.0
    %90 = vmatpush1.msra.mxu0 0.0
    %91 = vmatprep.subr.mxu0 0.0
    %92 = vmatpush1.msra.mxu0 0.0
    %93 = vmatprep.subr.mxu0 0.0
    %94 = vmatpush1.msra.mxu0 0.0
    %95 = vmatprep.subr.mxu0 0.0
    %96 = vmatpush1.msra.mxu0 0.0
    %97 = vmatprep.subr.mxu0 0.0
    %98 = vmatpush1.msra.mxu0 0.0
    %99 = vmatprep.subr.mxu0 0.0
    %100 = vmatpush1.msra.mxu0 0.0
    %101 = vmatprep.subr.mxu0 0.0
    %102 = vmatpush1.msra.mxu0 0.0
    %103 = vmatprep.subr.mxu0 0.0
    %104 = vmatpush1.msra.mxu0 %v65
    %105 = vmatprep.subr.mxu0 0.0
    %106 = vmatpush1.msra.mxu0 %v64
    %107 = vmatprep.subr.mxu0 0.0
    %108 = vmatpush1.msra.mxu0 %v63
    %109 = vmatprep.subr.mxu0 0.0
    %110 = vmatpush1.msra.mxu0 %v62
    %111 = vmatprep.subr.mxu0 0.0
    %112 = vmatpush2.msra.mxu0 0.0
    %113 = vmatprep.subr.mxu0 0.0
    %114 = vmatpush2.msra.mxu0 0.0
    %115 = vmatprep.subr.mxu0 0.0
    %116 = vmatpush2.msra.mxu0 0.0
    %117 = vmatprep.subr.mxu0 0.0
    %118 = vmatpush2.msra.mxu0 0.0
    %119 = vmatprep.subr.mxu0 0.0
    %120 = vmatpush2.msra.mxu0 0.0
    %121 = vmatprep.subr.mxu0 0.0
    %122 = vmatpush2.msra.mxu0 0.0
    %123 = vmatprep.subr.mxu0 0.0
    %124 = vmatpush2.msra.mxu0 0.0
    %125 = vmatprep.subr.mxu0 0.0
    %126 = vmatpush2.msra.mxu0 0.0
    %127 = vmatprep.subr.mxu0 0.0
    %128 = vmatpush2.msra.mxu0 0.0
    %129 = vmatprep.subr.mxu0 0.0
    %130 = vmatpush2.msra.mxu0 0.0
    %131 = vmatprep.subr.mxu0 0.0
    %132 = vmatpush2.msra.mxu0 0.0
    %133 = vmatprep.subr.mxu0 0.0
    %134 = vmatpush2.msra.mxu0 0.0
    %135 = vmatprep.subr.mxu0 0.0
    %136 = vmatpush2.msra.mxu0 0.0
    %137 = vmatprep.subr.mxu0 0.0
    %138 = vmatpush2.msra.mxu0 0.0
    %139 = vmatprep.subr.mxu0 0.0
    %140 = vmatpush2.msra.mxu0 0.0
    %141 = vmatprep.subr.mxu0 0.0
    %142 = vmatpush2.msra.mxu0 0.0
    %143 = vmatprep.mubr.f32.mxu0 0.0
    %144 = vmatmul.mubr.f32.gmra.mxu0 %v77
    %v145 = vpop.f32.mrf.mxu0
    %v146 = vadd.f32 %v73, %v145
    %v147 = vpop.f32.mrf.mxu0
    %148 = vdwg.mxu0
    %v149 = vtanh.pop %v146
    %v150 = vsub.f32 %v68, %v149
    %v151 = vld [vmem:[%s1] sm:$0xf]
    %153 = vset.pattern.permute.xlu0 0
    %154 = vperm.xlu0 %153, %v151
    %v155 = vpop.permute.xlu0 %154
    %v157 = vmul.f32 %v155, %v149
    %v158 = vadd.f32 %v150, %v157
    %v159 = vld [vmem:[%s0] sm:$0xf]
    %v161 = vsel %vm75, %v67, 0
    %163 = vmatprep.subr.mxu0 0.0
    %164 = vmatpush1.msra.mxu0 0.0
    %165 = vmatprep.subr.mxu0 0.0
    %166 = vmatpush1.msra.mxu0 0.0
    %167 = vmatprep.subr.mxu0 0.0
    %168 = vmatpush1.msra.mxu0 0.0
    %169 = vmatprep.subr.mxu0 0.0
    %170 = vmatpush1.msra.mxu0 0.0
    %171 = vmatprep.subr.mxu0 0.0
    %172 = vmatpush1.msra.mxu0 0.0
    %173 = vmatprep.subr.mxu0 0.0
    %174 = vmatpush1.msra.mxu0 0.0
    %175 = vmatprep.subr.mxu0 0.0
    %176 = vmatpush1.msra.mxu0 0.0
    %177 = vmatprep.subr.mxu0 0.0
    %178 = vmatpush1.msra.mxu0 0.0
    %179 = vmatprep.subr.mxu0 0.0
    %180 = vmatpush1.msra.mxu0 0.0
    %181 = vmatprep.subr.mxu0 0.0
    %182 = vmatpush1.msra.mxu0 0.0
    %183 = vmatprep.subr.mxu0 0.0
    %184 = vmatpush1.msra.mxu0 0.0
    %185 = vmatprep.subr.mxu0 0.0
    %186 = vmatpush1.msra.mxu0 0.0
    %187 = vmatprep.subr.mxu0 0.0
    %188 = vmatpush1.msra.mxu0 %v61
    %189 = vmatprep.subr.mxu0 0.0
    %190 = vmatpush1.msra.mxu0 %v60
    %191 = vmatprep.subr.mxu0 0.0
    %192 = vmatpush1.msra.mxu0 %v59
    %193 = vmatprep.subr.mxu0 0.0
    %194 = vmatpush1.msra.mxu0 %v58
    %195 = vmatprep.subr.mxu0 0.0
    %196 = vmatpush2.msra.mxu0 0.0
    %197 = vmatprep.subr.mxu0 0.0
    %198 = vmatpush2.msra.mxu0 0.0
    %199 = vmatprep.subr.mxu0 0.0
    %200 = vmatpush2.msra.mxu0 0.0
    %201 = vmatprep.subr.mxu0 0.0
    %202 = vmatpush2.msra.mxu0 0.0
    %203 = vmatprep.subr.mxu0 0.0
    %204 = vmatpush2.msra.mxu0 0.0
    %205 = vmatprep.subr.mxu0 0.0
    %206 = vmatpush2.msra.mxu0 0.0
    %207 = vmatprep.subr.mxu0 0.0
    %208 = vmatpush2.msra.mxu0 0.0
    %209 = vmatprep.subr.mxu0 0.0
    %210 = vmatpush2.msra.mxu0 0.0
    %211 = vmatprep.subr.mxu0 0.0
    %212 = vmatpush2.msra.mxu0 0.0
    %213 = vmatprep.subr.mxu0 0.0
    %214 = vmatpush2.msra.mxu0 0.0
    %215 = vmatprep.subr.mxu0 0.0
    %216 = vmatpush2.msra.mxu0 0.0
    %217 = vmatprep.subr.mxu0 0.0
    %218 = vmatpush2.msra.mxu0 0.0
    %219 = vmatprep.subr.mxu0 0.0
    %220 = vmatpush2.msra.mxu0 0.0
    %221 = vmatprep.subr.mxu0 0.0
    %222 = vmatpush2.msra.mxu0 0.0
    %223 = vmatprep.subr.mxu0 0.0
    %224 = vmatpush2.msra.mxu0 0.0
    %225 = vmatprep.subr.mxu0 0.0
    %226 = vmatpush2.msra.mxu0 0.0
    %227 = vmatprep.mubr.f32.mxu0 0.0
    %228 = vmatmul.mubr.f32.gmra.mxu0 %v161
    %v229 = vpop.f32.mrf.mxu0
    %v230 = vadd.f32 0.0, %v229
    %v231 = vpop.f32.mrf.mxu0
    %232 = vdwg.mxu0
    %v233 = vadd.f32 %v159, %v230
    %v234 = vxor.u32 %v233, 2147483648
    %v235 = vmul.f32 %v234, 1.442695
    %v236 = vpow.pop %v235
    %v237 = vadd.f32 %v236, 1.0
    %v238 = vrcp.pop %v237
    %v239 = vmul.f32 1.0, %v238
    %v240 = vtanh.pop %v233
    %242 = vrot.lane.b32.xlu0 %v158, 32
    %v243 = vpop.permute.xlu0 %242
    %v245 = vmul.f32 %v239, %v243
    %247 = vrot.lane.b32.xlu0 %v240, 64
    %v248 = vpop.permute.xlu0 %247
    %v250 = vmul.f32 %v239, %v248
    %252 = vrot.lane.b32.xlu0 %v250, 32
    %v253 = vpop.permute.xlu0 %252
    %v255 = vadd.f32 %v245, %v253
    %v256 = vtanh.pop %v255
    %258 = vrot.lane.b32.xlu0 %v256, 64
    %v259 = vpop.permute.xlu0 %258
    %v261 = vmul.f32 %v239, %v259
    %263 = vrot.lane.b32.xlu0 %v261, 32
    %v264 = vpop.permute.xlu0 %263
    %vm266 = vcmask 257024
    %267 = vst.msk [vmem:[#allocation7] sm:$0xf] %vm266, %v264
    %269 = vrot.lane.b32.xlu0 %v255, 96
    %v270 = vpop.permute.xlu0 %269
    %272 = vst.msk [vmem:[#allocation8] sm:$0xf] %vm266, %v270
    %v273 = vsel %vm75, %v270, 0
    %275 = vmatprep.subr.mxu0 0.0
    %276 = vmatpush1.msra.mxu0 0.0
    %277 = vmatprep.subr.mxu0 0.0
    %278 = vmatpush1.msra.mxu0 0.0
    %279 = vmatprep.subr.mxu0 0.0
    %280 = vmatpush1.msra.mxu0 0.0
    %281 = vmatprep.subr.mxu0 0.0
    %282 = vmatpush1.msra.mxu0 0.0
    %283 = vmatprep.subr.mxu0 0.0
    %284 = vmatpush1.msra.mxu0 0.0
    %285 = vmatprep.subr.mxu0 0.0
    %286 = vmatpush1.msra.mxu0 0.0
    %287 = vmatprep.subr.mxu0 0.0
    %288 = vmatpush1.msra.mxu0 0.0
    %289 = vmatprep.subr.mxu0 0.0
    %290 = vmatpush1.msra.mxu0 0.0
    %291 = vmatprep.subr.mxu0 0.0
    %292 = vmatpush1.msra.mxu0 0.0
    %293 = vmatprep.subr.mxu0 0.0
    %294 = vmatpush1.msra.mxu0 0.0
    %295 = vmatprep.subr.mxu0 0.0
    %296 = vmatpush1.msra.mxu0 0.0
    %297 = vmatprep.subr.mxu0 0.0
    %298 = vmatpush1.msra.mxu0 0.0
    %299 = vmatprep.subr.mxu0 0.0
    %300 = vmatpush1.msra.mxu0 %v65
    %301 = vmatprep.subr.mxu0 0.0
    %302 = vmatpush1.msra.mxu0 %v64
    %303 = vmatprep.subr.mxu0 0.0
    %304 = vmatpush1.msra.mxu0 %v63
    %305 = vmatprep.subr.mxu0 0.0
    %306 = vmatpush1.msra.mxu0 %v62
    %307 = vmatprep.subr.mxu0 0.0
    %308 = vmatpush2.msra.mxu0 0.0
    %309 = vmatprep.subr.mxu0 0.0
    %310 = vmatpush2.msra.mxu0 0.0
    %311 = vmatprep.subr.mxu0 0.0
    %312 = vmatpush2.msra.mxu0 0.0
    %313 = vmatprep.subr.mxu0 0.0
    %314 = vmatpush2.msra.mxu0 0.0
    %315 = vmatprep.subr.mxu0 0.0
    %316 = vmatpush2.msra.mxu0 0.0
    %317 = vmatprep.subr.mxu0 0.0
    %318 = vmatpush2.msra.mxu0 0.0
    %319 = vmatprep.subr.mxu0 0.0
    %320 = vmatpush2.msra.mxu0 0.0
    %321 = vmatprep.subr.mxu0 0.0
    %322 = vmatpush2.msra.mxu0 0.0
    %323 = vmatprep.subr.mxu0 0.0
    %324 = vmatpush2.msra.mxu0 0.0
    %325 = vmatprep.subr.mxu0 0.0
    %326 = vmatpush2.msra.mxu0 0.0
    %327 = vmatprep.subr.mxu0 0.0
    %328 = vmatpush2.msra.mxu0 0.0
    %329 = vmatprep.subr.mxu0 0.0
    %330 = vmatpush2.msra.mxu0 0.0
    %331 = vmatprep.subr.mxu0 0.0
    %332 = vmatpush2.msra.mxu0 0.0
    %333 = vmatprep.subr.mxu0 0.0
    %334 = vmatpush2.msra.mxu0 0.0
    %335 = vmatprep.subr.mxu0 0.0
    %336 = vmatpush2.msra.mxu0 0.0
    %337 = vmatprep.subr.mxu0 0.0
    %338 = vmatpush2.msra.mxu0 0.0
    %339 = vmatprep.mubr.f32.mxu0 0.0
    %340 = vmatmul.mubr.f32.gmra.mxu0 %v273
    %v341 = vpop.f32.mrf.mxu0
    %v342 = vadd.f32 %v73, %v341
    %v343 = vpop.f32.mrf.mxu0
    %344 = vdwg.mxu0
    %v345 = vtanh.pop %v342
    %347 = vrot.lane.b32.xlu0 %v345, 32
    %v348 = vpop.permute.xlu0 %347
    %v350 = vsub.f32 %v255, %v348
    %s351 = scalar_lea.vmem %s1, 4
    %v352 = vld [vmem:[%s351] sm:$0xf]
    %354 = vset.pattern.permute.xlu0 0
    %355 = vperm.xlu0 %354, %v352
    %v356 = vpop.permute.xlu0 %355
    %v358 = vmul.f32 %v356, %v345
    %360 = vrot.lane.b32.xlu0 %v358, 32
    %v361 = vpop.permute.xlu0 %360
    %v363 = vadd.f32 %v350, %v361
    %s364 = scalar_lea.vmem %s0, 4
    %v365 = vld [vmem:[%s364] sm:$0xf]
    %v366 = vsel %vm75, %v264, 0
    %368 = vmatprep.subr.mxu0 0.0
    %369 = vmatpush1.msra.mxu0 0.0
    %370 = vmatprep.subr.mxu0 0.0
    %371 = vmatpush1.msra.mxu0 0.0
    %372 = vmatprep.subr.mxu0 0.0
    %373 = vmatpush1.msra.mxu0 0.0
    %374 = vmatprep.subr.mxu0 0.0
    %375 = vmatpush1.msra.mxu0 0.0
    %376 = vmatprep.subr.mxu0 0.0
    %377 = vmatpush1.msra.mxu0 0.0
    %378 = vmatprep.subr.mxu0 0.0
    %379 = vmatpush1.msra.mxu0 0.0
    %380 = vmatprep.subr.mxu0 0.0
    %381 = vmatpush1.msra.mxu0 0.0
    %382 = vmatprep.subr.mxu0 0.0
    %383 = vmatpush1.msra.mxu0 0.0
    %384 = vmatprep.subr.mxu0 0.0
    %385 = vmatpush1.msra.mxu0 0.0
    %386 = vmatprep.subr.mxu0 0.0
    %387 = vmatpush1.msra.mxu0 0.0
    %388 = vmatprep.subr.mxu0 0.0
    %389 = vmatpush1.msra.mxu0 0.0
    %390 = vmatprep.subr.mxu0 0.0
    %391 = vmatpush1.msra.mxu0 0.0
    %392 = vmatprep.subr.mxu0 0.0
    %393 = vmatpush1.msra.mxu0 %v61
    %394 = vmatprep.subr.mxu0 0.0
    %395 = vmatpush1.msra.mxu0 %v60
    %396 = vmatprep.subr.mxu0 0.0
    %397 = vmatpush1.msra.mxu0 %v59
    %398 = vmatprep.subr.mxu0 0.0
    %399 = vmatpush1.msra.mxu0 %v58
    %400 = vmatprep.subr.mxu0 0.0
    %401 = vmatpush2.msra.mxu0 0.0
    %402 = vmatprep.subr.mxu0 0.0
    %403 = vmatpush2.msra.mxu0 0.0
    %404 = vmatprep.subr.mxu0 0.0
    %405 = vmatpush2.msra.mxu0 0.0
    %406 = vmatprep.subr.mxu0 0.0
    %407 = vmatpush2.msra.mxu0 0.0
    %408 = vmatprep.subr.mxu0 0.0
    %409 = vmatpush2.msra.mxu0 0.0
    %410 = vmatprep.subr.mxu0 0.0
    %411 = vmatpush2.msra.mxu0 0.0
    %412 = vmatprep.subr.mxu0 0.0
    %413 = vmatpush2.msra.mxu0 0.0
    %414 = vmatprep.subr.mxu0 0.0
    %415 = vmatpush2.msra.mxu0 0.0
    %416 = vmatprep.subr.mxu0 0.0
    %417 = vmatpush2.msra.mxu0 0.0
    %418 = vmatprep.subr.mxu0 0.0
    %419 = vmatpush2.msra.mxu0 0.0
    %420 = vmatprep.subr.mxu0 0.0
    %421 = vmatpush2.msra.mxu0 0.0
    %422 = vmatprep.subr.mxu0 0.0
    %423 = vmatpush2.msra.mxu0 0.0
    %424 = vmatprep.subr.mxu0 0.0
    %425 = vmatpush2.msra.mxu0 0.0
    %426 = vmatprep.subr.mxu0 0.0
    %427 = vmatpush2.msra.mxu0 0.0
    %428 = vmatprep.subr.mxu0 0.0
    %429 = vmatpush2.msra.mxu0 0.0
    %430 = vmatprep.subr.mxu0 0.0
    %431 = vmatpush2.msra.mxu0 0.0
    %432 = vmatprep.mubr.f32.mxu0 0.0
    %433 = vmatmul.mubr.f32.gmra.mxu0 %v366
    %v434 = vpop.f32.mrf.mxu0
    %v435 = vadd.f32 0.0, %v434
    %v436 = vpop.f32.mrf.mxu0
    %437 = vdwg.mxu0
    %v438 = vadd.f32 %v365, %v435
    %v439 = vxor.u32 %v438, 2147483648
    %v440 = vmul.f32 %v439, 1.442695
    %v441 = vpow.pop %v440
    %v442 = vadd.f32 %v441, 1.0
    %v443 = vrcp.pop %v442
    %v444 = vmul.f32 1.0, %v443
    %v445 = vtanh.pop %v438
    %v446 = vmul.f32 %v444, %v363
    %448 = vrot.lane.b32.xlu0 %v445, 64
    %v449 = vpop.permute.xlu0 %448
    %v451 = vmul.f32 %v444, %v449
    %453 = vrot.lane.b32.xlu0 %v451, 32
    %v454 = vpop.permute.xlu0 %453
    %v456 = vadd.f32 %v446, %v454
    %v457 = vtanh.pop %v456
    %459 = vrot.lane.b32.xlu0 %v457, 64
    %v460 = vpop.permute.xlu0 %459
    %v462 = vmul.f32 %v444, %v460
    %464 = vrot.lane.b32.xlu0 %v462, 32
    %v465 = vpop.permute.xlu0 %464
    %s467 = scalar_lea.vmem [#allocation7], 4
    %468 = vst.msk [vmem:[%s467] sm:$0xf] %vm266, %v465
    %470 = vrot.lane.b32.xlu0 %v456, 96
    %v471 = vpop.permute.xlu0 %470
    %s473 = scalar_lea.vmem [#allocation8], 4
    %474 = vst.msk [vmem:[%s473] sm:$0xf] %vm266, %v471
    %v475 = vsel %vm75, %v471, 0
    %477 = vmatprep.subr.mxu0 0.0
    %478 = vmatpush1.msra.mxu0 0.0
    %479 = vmatprep.subr.mxu0 0.0
    %480 = vmatpush1.msra.mxu0 0.0
    %481 = vmatprep.subr.mxu0 0.0
    %482 = vmatpush1.msra.mxu0 0.0
    %483 = vmatprep.subr.mxu0 0.0
    %484 = vmatpush1.msra.mxu0 0.0
    %485 = vmatprep.subr.mxu0 0.0
    %486 = vmatpush1.msra.mxu0 0.0
    %487 = vmatprep.subr.mxu0 0.0
    %488 = vmatpush1.msra.mxu0 0.0
    %489 = vmatprep.subr.mxu0 0.0
    %490 = vmatpush1.msra.mxu0 0.0
    %491 = vmatprep.subr.mxu0 0.0
    %492 = vmatpush1.msra.mxu0 0.0
    %493 = vmatprep.subr.mxu0 0.0
    %494 = vmatpush1.msra.mxu0 0.0
    %495 = vmatprep.subr.mxu0 0.0
    %496 = vmatpush1.msra.mxu0 0.0
    %497 = vmatprep.subr.mxu0 0.0
    %498 = vmatpush1.msra.mxu0 0.0
    %499 = vmatprep.subr.mxu0 0.0
    %500 = vmatpush1.msra.mxu0 0.0
    %501 = vmatprep.subr.mxu0 0.0
    %502 = vmatpush1.msra.mxu0 %v65
    %503 = vmatprep.subr.mxu0 0.0
    %504 = vmatpush1.msra.mxu0 %v64
    %505 = vmatprep.subr.mxu0 0.0
    %506 = vmatpush1.msra.mxu0 %v63
    %507 = vmatprep.subr.mxu0 0.0
    %508 = vmatpush1.msra.mxu0 %v62
    %509 = vmatprep.subr.mxu0 0.0
    %510 = vmatpush2.msra.mxu0 0.0
    %511 = vmatprep.subr.mxu0 0.0
    %512 = vmatpush2.msra.mxu0 0.0
    %513 = vmatprep.subr.mxu0 0.0
    %514 = vmatpush2.msra.mxu0 0.0
    %515 = vmatprep.subr.mxu0 0.0
    %516 = vmatpush2.msra.mxu0 0.0
    %517 = vmatprep.subr.mxu0 0.0
    %518 = vmatpush2.msra.mxu0 0.0
    %519 = vmatprep.subr.mxu0 0.0
    %520 = vmatpush2.msra.mxu0 0.0
    %521 = vmatprep.subr.mxu0 0.0
    %522 = vmatpush2.msra.mxu0 0.0
    %523 = vmatprep.subr.mxu0 0.0
    %524 = vmatpush2.msra.mxu0 0.0
    %525 = vmatprep.subr.mxu0 0.0
    %526 = vmatpush2.msra.mxu0 0.0
    %527 = vmatprep.subr.mxu0 0.0
    %528 = vmatpush2.msra.mxu0 0.0
    %529 = vmatprep.subr.mxu0 0.0
    %530 = vmatpush2.msra.mxu0 0.0
    %531 = vmatprep.subr.mxu0 0.0
    %532 = vmatpush2.msra.mxu0 0.0
    %533 = vmatprep.subr.mxu0 0.0
    %534 = vmatpush2.msra.mxu0 0.0
    %535 = vmatprep.subr.mxu0 0.0
    %536 = vmatpush2.msra.mxu0 0.0
    %537 = vmatprep.subr.mxu0 0.0
    %538 = vmatpush2.msra.mxu0 0.0
    %539 = vmatprep.subr.mxu0 0.0
    %540 = vmatpush2.msra.mxu0 0.0
    %541 = vmatprep.mubr.f32.mxu0 0.0
    %542 = vmatmul.mubr.f32.gmra.mxu0 %v475
    %v543 = vpop.f32.mrf.mxu0
    %v544 = vadd.f32 %v73, %v543
    %v545 = vpop.f32.mrf.mxu0
    %546 = vdwg.mxu0
    %v547 = vtanh.pop %v544
    %549 = vrot.lane.b32.xlu0 %v547, 32
    %v550 = vpop.permute.xlu0 %549
    %v552 = vsub.f32 %v456, %v550
    %s553 = scalar_lea.vmem %s1, 8
    %v554 = vld [vmem:[%s553] sm:$0xf]
    %556 = vset.pattern.permute.xlu0 0
    %557 = vperm.xlu0 %556, %v554
    %v558 = vpop.permute.xlu0 %557
    %v560 = vmul.f32 %v558, %v547
    %562 = vrot.lane.b32.xlu0 %v560, 32
    %v563 = vpop.permute.xlu0 %562
    %v565 = vadd.f32 %v552, %v563
    %s566 = scalar_lea.vmem %s0, 8
    %v567 = vld [vmem:[%s566] sm:$0xf]
    %v568 = vsel %vm75, %v465, 0
    %570 = vmatprep.subr.mxu0 0.0
    %571 = vmatpush1.msra.mxu0 0.0
    %572 = vmatprep.subr.mxu0 0.0
    %573 = vmatpush1.msra.mxu0 0.0
    %574 = vmatprep.subr.mxu0 0.0
    %575 = vmatpush1.msra.mxu0 0.0
    %576 = vmatprep.subr.mxu0 0.0
    %577 = vmatpush1.msra.mxu0 0.0
    %578 = vmatprep.subr.mxu0 0.0
    %579 = vmatpush1.msra.mxu0 0.0
    %580 = vmatprep.subr.mxu0 0.0
    %581 = vmatpush1.msra.mxu0 0.0
    %582 = vmatprep.subr.mxu0 0.0
    %583 = vmatpush1.msra.mxu0 0.0
    %584 = vmatprep.subr.mxu0 0.0
    %585 = vmatpush1.msra.mxu0 0.0
    %586 = vmatprep.subr.mxu0 0.0
    %587 = vmatpush1.msra.mxu0 0.0
    %588 = vmatprep.subr.mxu0 0.0
    %589 = vmatpush1.msra.mxu0 0.0
    %590 = vmatprep.subr.mxu0 0.0
    %591 = vmatpush1.msra.mxu0 0.0
    %592 = vmatprep.subr.mxu0 0.0
    %593 = vmatpush1.msra.mxu0 0.0
    %594 = vmatprep.subr.mxu0 0.0
    %595 = vmatpush1.msra.mxu0 %v61
    %596 = vmatprep.subr.mxu0 0.0
    %597 = vmatpush1.msra.mxu0 %v60
    %598 = vmatprep.subr.mxu0 0.0
    %599 = vmatpush1.msra.mxu0 %v59
    %600 = vmatprep.subr.mxu0 0.0
    %601 = vmatpush1.msra.mxu0 %v58
    %602 = vmatprep.subr.mxu0 0.0
    %603 = vmatpush2.msra.mxu0 0.0
    %604 = vmatprep.subr.mxu0 0.0
    %605 = vmatpush2.msra.mxu0 0.0
    %606 = vmatprep.subr.mxu0 0.0
    %607 = vmatpush2.msra.mxu0 0.0
    %608 = vmatprep.subr.mxu0 0.0
    %609 = vmatpush2.msra.mxu0 0.0
    %610 = vmatprep.subr.mxu0 0.0
    %611 = vmatpush2.msra.mxu0 0.0
    %612 = vmatprep.subr.mxu0 0.0
    %613 = vmatpush2.msra.mxu0 0.0
    %614 = vmatprep.subr.mxu0 0.0
    %615 = vmatpush2.msra.mxu0 0.0
    %616 = vmatprep.subr.mxu0 0.0
    %617 = vmatpush2.msra.mxu0 0.0
    %618 = vmatprep.subr.mxu0 0.0
    %619 = vmatpush2.msra.mxu0 0.0
    %620 = vmatprep.subr.mxu0 0.0
    %621 = vmatpush2.msra.mxu0 0.0
    %622 = vmatprep.subr.mxu0 0.0
    %623 = vmatpush2.msra.mxu0 0.0
    %624 = vmatprep.subr.mxu0 0.0
    %625 = vmatpush2.msra.mxu0 0.0
    %626 = vmatprep.subr.mxu0 0.0
    %627 = vmatpush2.msra.mxu0 0.0
    %628 = vmatprep.subr.mxu0 0.0
    %629 = vmatpush2.msra.mxu0 0.0
    %630 = vmatprep.subr.mxu0 0.0
    %631 = vmatpush2.msra.mxu0 0.0
    %632 = vmatprep.subr.mxu0 0.0
    %633 = vmatpush2.msra.mxu0 0.0
    %634 = vmatprep.mubr.f32.mxu0 0.0
    %635 = vmatmul.mubr.f32.gmra.mxu0 %v568
    %v636 = vpop.f32.mrf.mxu0
    %v637 = vadd.f32 0.0, %v636
    %v638 = vpop.f32.mrf.mxu0
    %639 = vdwg.mxu0
    %v640 = vadd.f32 %v567, %v637
    %v641 = vxor.u32 %v640, 2147483648
    %v642 = vmul.f32 %v641, 1.442695
    %v643 = vpow.pop %v642
    %v644 = vadd.f32 %v643, 1.0
    %v645 = vrcp.pop %v644
    %v646 = vmul.f32 1.0, %v645
    %v647 = vtanh.pop %v640
    %v648 = vmul.f32 %v646, %v565
    %650 = vrot.lane.b32.xlu0 %v647, 64
    %v651 = vpop.permute.xlu0 %650
    %v653 = vmul.f32 %v646, %v651
    %655 = vrot.lane.b32.xlu0 %v653, 32
    %v656 = vpop.permute.xlu0 %655
    %v658 = vadd.f32 %v648, %v656
    %v659 = vtanh.pop %v658
    %661 = vrot.lane.b32.xlu0 %v659, 64
    %v662 = vpop.permute.xlu0 %661
    %v664 = vmul.f32 %v646, %v662
    %666 = vrot.lane.b32.xlu0 %v664, 32
    %v667 = vpop.permute.xlu0 %666
    %s669 = scalar_lea.vmem [#allocation7], 8
    %670 = vst.msk [vmem:[%s669] sm:$0xf] %vm266, %v667
    %672 = vrot.lane.b32.xlu0 %v658, 96
    %v673 = vpop.permute.xlu0 %672
    %s675 = scalar_lea.vmem [#allocation8], 8
    %676 = vst.msk [vmem:[%s675] sm:$0xf] %vm266, %v673
    %v677 = vsel %vm75, %v673, 0
    %679 = vmatprep.subr.mxu0 0.0
    %680 = vmatpush1.msra.mxu0 0.0
    %681 = vmatprep.subr.mxu0 0.0
    %682 = vmatpush1.msra.mxu0 0.0
    %683 = vmatprep.subr.mxu0 0.0
    %684 = vmatpush1.msra.mxu0 0.0
    %685 = vmatprep.subr.mxu0 0.0
    %686 = vmatpush1.msra.mxu0 0.0
    %687 = vmatprep.subr.mxu0 0.0
    %688 = vmatpush1.msra.mxu0 0.0
    %689 = vmatprep.subr.mxu0 0.0
    %690 = vmatpush1.msra.mxu0 0.0
    %691 = vmatprep.subr.mxu0 0.0
    %692 = vmatpush1.msra.mxu0 0.0
    %693 = vmatprep.subr.mxu0 0.0
    %694 = vmatpush1.msra.mxu0 0.0
    %695 = vmatprep.subr.mxu0 0.0
    %696 = vmatpush1.msra.mxu0 0.0
    %697 = vmatprep.subr.mxu0 0.0
    %698 = vmatpush1.msra.mxu0 0.0
    %699 = vmatprep.subr.mxu0 0.0
    %700 = vmatpush1.msra.mxu0 0.0
    %701 = vmatprep.subr.mxu0 0.0
    %702 = vmatpush1.msra.mxu0 0.0
    %703 = vmatprep.subr.mxu0 0.0
    %704 = vmatpush1.msra.mxu0 %v65
    %705 = vmatprep.subr.mxu0 0.0
    %706 = vmatpush1.msra.mxu0 %v64
    %707 = vmatprep.subr.mxu0 0.0
    %708 = vmatpush1.msra.mxu0 %v63
    %709 = vmatprep.subr.mxu0 0.0
    %710 = vmatpush1.msra.mxu0 %v62
    %711 = vmatprep.subr.mxu0 0.0
    %712 = vmatpush2.msra.mxu0 0.0
    %713 = vmatprep.subr.mxu0 0.0
    %714 = vmatpush2.msra.mxu0 0.0
    %715 = vmatprep.subr.mxu0 0.0
    %716 = vmatpush2.msra.mxu0 0.0
    %717 = vmatprep.subr.mxu0 0.0
    %718 = vmatpush2.msra.mxu0 0.0
    %719 = vmatprep.subr.mxu0 0.0
    %720 = vmatpush2.msra.mxu0 0.0
    %721 = vmatprep.subr.mxu0 0.0
    %722 = vmatpush2.msra.mxu0 0.0
    %723 = vmatprep.subr.mxu0 0.0
    %724 = vmatpush2.msra.mxu0 0.0
    %725 = vmatprep.subr.mxu0 0.0
    %726 = vmatpush2.msra.mxu0 0.0
    %727 = vmatprep.subr.mxu0 0.0
    %728 = vmatpush2.msra.mxu0 0.0
    %729 = vmatprep.subr.mxu0 0.0
    %730 = vmatpush2.msra.mxu0 0.0
    %731 = vmatprep.subr.mxu0 0.0
    %732 = vmatpush2.msra.mxu0 0.0
    %733 = vmatprep.subr.mxu0 0.0
    %734 = vmatpush2.msra.mxu0 0.0
    %735 = vmatprep.subr.mxu0 0.0
    %736 = vmatpush2.msra.mxu0 0.0
    %737 = vmatprep.subr.mxu0 0.0
    %738 = vmatpush2.msra.mxu0 0.0
    %739 = vmatprep.subr.mxu0 0.0
    %740 = vmatpush2.msra.mxu0 0.0
    %741 = vmatprep.subr.mxu0 0.0
    %742 = vmatpush2.msra.mxu0 0.0
    %743 = vmatprep.mubr.f32.mxu0 0.0
    %744 = vmatmul.mubr.f32.gmra.mxu0 %v677
    %v745 = vpop.f32.mrf.mxu0
    %v746 = vadd.f32 %v73, %v745
    %v747 = vpop.f32.mrf.mxu0
    %748 = vdwg.mxu0
    %v749 = vtanh.pop %v746
    %751 = vrot.lane.b32.xlu0 %v749, 32
    %v752 = vpop.permute.xlu0 %751
    %v754 = vsub.f32 %v658, %v752
    %s755 = scalar_lea.vmem %s1, 12
    %v756 = vld [vmem:[%s755] sm:$0xf]
    %758 = vset.pattern.permute.xlu0 0
    %759 = vperm.xlu0 %758, %v756
    %v760 = vpop.permute.xlu0 %759
    %v762 = vmul.f32 %v760, %v749
    %764 = vrot.lane.b32.xlu0 %v762, 32
    %v765 = vpop.permute.xlu0 %764
    %v767 = vadd.f32 %v754, %v765
    %s768 = scalar_lea.vmem %s0, 12
    %v769 = vld [vmem:[%s768] sm:$0xf]
    %v770 = vsel %vm75, %v667, 0
    %772 = vmatprep.subr.mxu0 0.0
    %773 = vmatpush1.msra.mxu0 0.0
    %774 = vmatprep.subr.mxu0 0.0
    %775 = vmatpush1.msra.mxu0 0.0
    %776 = vmatprep.subr.mxu0 0.0
    %777 = vmatpush1.msra.mxu0 0.0
    %778 = vmatprep.subr.mxu0 0.0
    %779 = vmatpush1.msra.mxu0 0.0
    %780 = vmatprep.subr.mxu0 0.0
    %781 = vmatpush1.msra.mxu0 0.0
    %782 = vmatprep.subr.mxu0 0.0
    %783 = vmatpush1.msra.mxu0 0.0
    %784 = vmatprep.subr.mxu0 0.0
    %785 = vmatpush1.msra.mxu0 0.0
    %786 = vmatprep.subr.mxu0 0.0
    %787 = vmatpush1.msra.mxu0 0.0
    %788 = vmatprep.subr.mxu0 0.0
    %789 = vmatpush1.msra.mxu0 0.0
    %790 = vmatprep.subr.mxu0 0.0
    %791 = vmatpush1.msra.mxu0 0.0
    %792 = vmatprep.subr.mxu0 0.0
    %793 = vmatpush1.msra.mxu0 0.0
    %794 = vmatprep.subr.mxu0 0.0
    %795 = vmatpush1.msra.mxu0 0.0
    %796 = vmatprep.subr.mxu0 0.0
    %797 = vmatpush1.msra.mxu0 %v61
    %798 = vmatprep.subr.mxu0 0.0
    %799 = vmatpush1.msra.mxu0 %v60
    %800 = vmatprep.subr.mxu0 0.0
    %801 = vmatpush1.msra.mxu0 %v59
    %802 = vmatprep.subr.mxu0 0.0
    %803 = vmatpush1.msra.mxu0 %v58
    %804 = vmatprep.subr.mxu0 0.0
    %805 = vmatpush2.msra.mxu0 0.0
    %806 = vmatprep.subr.mxu0 0.0
    %807 = vmatpush2.msra.mxu0 0.0
    %808 = vmatprep.subr.mxu0 0.0
    %809 = vmatpush2.msra.mxu0 0.0
    %810 = vmatprep.subr.mxu0 0.0
    %811 = vmatpush2.msra.mxu0 0.0
    %812 = vmatprep.subr.mxu0 0.0
    %813 = vmatpush2.msra.mxu0 0.0
    %814 = vmatprep.subr.mxu0 0.0
    %815 = vmatpush2.msra.mxu0 0.0
    %816 = vmatprep.subr.mxu0 0.0
    %817 = vmatpush2.msra.mxu0 0.0
    %818 = vmatprep.subr.mxu0 0.0
    %819 = vmatpush2.msra.mxu0 0.0
    %820 = vmatprep.subr.mxu0 0.0
    %821 = vmatpush2.msra.mxu0 0.0
    %822 = vmatprep.subr.mxu0 0.0
    %823 = vmatpush2.msra.mxu0 0.0
    %824 = vmatprep.subr.mxu0 0.0
    %825 = vmatpush2.msra.mxu0 0.0
    %826 = vmatprep.subr.mxu0 0.0
    %827 = vmatpush2.msra.mxu0 0.0
    %828 = vmatprep.subr.mxu0 0.0
    %829 = vmatpush2.msra.mxu0 0.0
    %830 = vmatprep.subr.mxu0 0.0
    %831 = vmatpush2.msra.mxu0 0.0
    %832 = vmatprep.subr.mxu0 0.0
    %833 = vmatpush2.msra.mxu0 0.0
    %834 = vmatprep.subr.mxu0 0.0
    %835 = vmatpush2.msra.mxu0 0.0
    %836 = vmatprep.mubr.f32.mxu0 0.0
    %837 = vmatmul.mubr.f32.gmra.mxu0 %v770
    %v838 = vpop.f32.mrf.mxu0
    %v839 = vadd.f32 0.0, %v838
    %v840 = vpop.f32.mrf.mxu0
    %841 = vdwg.mxu0
    %v842 = vadd.f32 %v769, %v839
    %v843 = vxor.u32 %v842, 2147483648
    %v844 = vmul.f32 %v843, 1.442695
    %v845 = vpow.pop %v844
    %v846 = vadd.f32 %v845, 1.0
    %v847 = vrcp.pop %v846
    %v848 = vmul.f32 1.0, %v847
    %v849 = vtanh.pop %v842
    %v850 = vmul.f32 %v848, %v767
    %852 = vrot.lane.b32.xlu0 %v849, 64
    %v853 = vpop.permute.xlu0 %852
    %v855 = vmul.f32 %v848, %v853
    %857 = vrot.lane.b32.xlu0 %v855, 32
    %v858 = vpop.permute.xlu0 %857
    %v860 = vadd.f32 %v850, %v858
    %v861 = vtanh.pop %v860
    %863 = vrot.lane.b32.xlu0 %v861, 64
    %v864 = vpop.permute.xlu0 %863
    %v866 = vmul.f32 %v848, %v864
    %868 = vrot.lane.b32.xlu0 %v866, 32
    %v869 = vpop.permute.xlu0 %868
    %s871 = scalar_lea.vmem [#allocation7], 12
    %872 = vst.msk [vmem:[%s871] sm:$0xf] %vm266, %v869
    %874 = vrot.lane.b32.xlu0 %v860, 96
    %v875 = vpop.permute.xlu0 %874
    %s877 = scalar_lea.vmem [#allocation8], 12
    %878 = vst.msk [vmem:[%s877] sm:$0xf] %vm266, %v875
    %v879 = vsel %vm75, %v875, 0
    %881 = vmatprep.subr.mxu0 0.0
    %882 = vmatpush1.msra.mxu0 0.0
    %883 = vmatprep.subr.mxu0 0.0
    %884 = vmatpush1.msra.mxu0 0.0
    %885 = vmatprep.subr.mxu0 0.0
    %886 = vmatpush1.msra.mxu0 0.0
    %887 = vmatprep.subr.mxu0 0.0
    %888 = vmatpush1.msra.mxu0 0.0
    %889 = vmatprep.subr.mxu0 0.0
    %890 = vmatpush1.msra.mxu0 0.0
    %891 = vmatprep.subr.mxu0 0.0
    %892 = vmatpush1.msra.mxu0 0.0
    %893 = vmatprep.subr.mxu0 0.0
    %894 = vmatpush1.msra.mxu0 0.0
    %895 = vmatprep.subr.mxu0 0.0
    %896 = vmatpush1.msra.mxu0 0.0
    %897 = vmatprep.subr.mxu0 0.0
    %898 = vmatpush1.msra.mxu0 0.0
    %899 = vmatprep.subr.mxu0 0.0
    %900 = vmatpush1.msra.mxu0 0.0
    %901 = vmatprep.subr.mxu0 0.0
    %902 = vmatpush1.msra.mxu0 0.0
    %903 = vmatprep.subr.mxu0 0.0
    %904 = vmatpush1.msra.mxu0 0.0
    %905 = vmatprep.subr.mxu0 0.0
    %906 = vmatpush1.msra.mxu0 %v65
    %907 = vmatprep.subr.mxu0 0.0
    %908 = vmatpush1.msra.mxu0 %v64
    %909 = vmatprep.subr.mxu0 0.0
    %910 = vmatpush1.msra.mxu0 %v63
    %911 = vmatprep.subr.mxu0 0.0
    %912 = vmatpush1.msra.mxu0 %v62
    %913 = vmatprep.subr.mxu0 0.0
    %914 = vmatpush2.msra.mxu0 0.0
    %915 = vmatprep.subr.mxu0 0.0
    %916 = vmatpush2.msra.mxu0 0.0
    %917 = vmatprep.subr.mxu0 0.0
    %918 = vmatpush2.msra.mxu0 0.0
    %919 = vmatprep.subr.mxu0 0.0
    %920 = vmatpush2.msra.mxu0 0.0
    %921 = vmatprep.subr.mxu0 0.0
    %922 = vmatpush2.msra.mxu0 0.0
    %923 = vmatprep.subr.mxu0 0.0
    %924 = vmatpush2.msra.mxu0 0.0
    %925 = vmatprep.subr.mxu0 0.0
    %926 = vmatpush2.msra.mxu0 0.0
    %927 = vmatprep.subr.mxu0 0.0
    %928 = vmatpush2.msra.mxu0 0.0
    %929 = vmatprep.subr.mxu0 0.0
    %930 = vmatpush2.msra.mxu0 0.0
    %931 = vmatprep.subr.mxu0 0.0
    %932 = vmatpush2.msra.mxu0 0.0
    %933 = vmatprep.subr.mxu0 0.0
    %934 = vmatpush2.msra.mxu0 0.0
    %935 = vmatprep.subr.mxu0 0.0
    %936 = vmatpush2.msra.mxu0 0.0
    %937 = vmatprep.subr.mxu0 0.0
    %938 = vmatpush2.msra.mxu0 0.0
    %939 = vmatprep.subr.mxu0 0.0
    %940 = vmatpush2.msra.mxu0 0.0
    %941 = vmatprep.subr.mxu0 0.0
    %942 = vmatpush2.msra.mxu0 0.0
    %943 = vmatprep.subr.mxu0 0.0
    %944 = vmatpush2.msra.mxu0 0.0
    %945 = vmatprep.mubr.f32.mxu0 0.0
    %946 = vmatmul.mubr.f32.gmra.mxu0 %v879
    %v947 = vpop.f32.mrf.mxu0
    %v948 = vadd.f32 %v73, %v947
    %v949 = vpop.f32.mrf.mxu0
    %950 = vdwg.mxu0
    %v951 = vtanh.pop %v948
    %953 = vrot.lane.b32.xlu0 %v951, 32
    %v954 = vpop.permute.xlu0 %953
    %v956 = vsub.f32 %v860, %v954
    %s957 = scalar_lea.vmem %s1, 16
    %v958 = vld [vmem:[%s957] sm:$0xf]
    %960 = vset.pattern.permute.xlu0 0
    %961 = vperm.xlu0 %960, %v958
    %v962 = vpop.permute.xlu0 %961
    %v964 = vmul.f32 %v962, %v951
    %966 = vrot.lane.b32.xlu0 %v964, 32
    %v967 = vpop.permute.xlu0 %966
    %v969 = vadd.f32 %v956, %v967
    %s970 = scalar_lea.vmem %s0, 16
    %v971 = vld [vmem:[%s970] sm:$0xf]
    %v972 = vsel %vm75, %v869, 0
    %974 = vmatprep.subr.mxu0 0.0
    %975 = vmatpush1.msra.mxu0 0.0
    %976 = vmatprep.subr.mxu0 0.0
    %977 = vmatpush1.msra.mxu0 0.0
    %978 = vmatprep.subr.mxu0 0.0
    %979 = vmatpush1.msra.mxu0 0.0
    %980 = vmatprep.subr.mxu0 0.0
    %981 = vmatpush1.msra.mxu0 0.0
    %982 = vmatprep.subr.mxu0 0.0
    %983 = vmatpush1.msra.mxu0 0.0
    %984 = vmatprep.subr.mxu0 0.0
    %985 = vmatpush1.msra.mxu0 0.0
    %986 = vmatprep.subr.mxu0 0.0
    %987 = vmatpush1.msra.mxu0 0.0
    %988 = vmatprep.subr.mxu0 0.0
    %989 = vmatpush1.msra.mxu0 0.0
    %990 = vmatprep.subr.mxu0 0.0
    %991 = vmatpush1.msra.mxu0 0.0
    %992 = vmatprep.subr.mxu0 0.0
    %993 = vmatpush1.msra.mxu0 0.0
    %994 = vmatprep.subr.mxu0 0.0
    %995 = vmatpush1.msra.mxu0 0.0
    %996 = vmatprep.subr.mxu0 0.0
    %997 = vmatpush1.msra.mxu0 0.0
    %998 = vmatprep.subr.mxu0 0.0
    %999 = vmatpush1.msra.mxu0 %v61
    %1000 = vmatprep.subr.mxu0 0.0
    %1001 = vmatpush1.msra.mxu0 %v60
    %1002 = vmatprep.subr.mxu0 0.0
    %1003 = vmatpush1.msra.mxu0 %v59
    %1004 = vmatprep.subr.mxu0 0.0
    %1005 = vmatpush1.msra.mxu0 %v58
    %1006 = vmatprep.subr.mxu0 0.0
    %1007 = vmatpush2.msra.mxu0 0.0
    %1008 = vmatprep.subr.mxu0 0.0
    %1009 = vmatpush2.msra.mxu0 0.0
    %1010 = vmatprep.subr.mxu0 0.0
    %1011 = vmatpush2.msra.mxu0 0.0
    %1012 = vmatprep.subr.mxu0 0.0
    %1013 = vmatpush2.msra.mxu0 0.0
    %1014 = vmatprep.subr.mxu0 0.0
    %1015 = vmatpush2.msra.mxu0 0.0
    %1016 = vmatprep.subr.mxu0 0.0
    %1017 = vmatpush2.msra.mxu0 0.0
    %1018 = vmatprep.subr.mxu0 0.0
    %1019 = vmatpush2.msra.mxu0 0.0
    %1020 = vmatprep.subr.mxu0 0.0
    %1021 = vmatpush2.msra.mxu0 0.0
    %1022 = vmatprep.subr.mxu0 0.0
    %1023 = vmatpush2.msra.mxu0 0.0
    %1024 = vmatprep.subr.mxu0 0.0
    %1025 = vmatpush2.msra.mxu0 0.0
    %1026 = vmatprep.subr.mxu0 0.0
    %1027 = vmatpush2.msra.mxu0 0.0
    %1028 = vmatprep.subr.mxu0 0.0
    %1029 = vmatpush2.msra.mxu0 0.0
    %1030 = vmatprep.subr.mxu0 0.0
    %1031 = vmatpush2.msra.mxu0 0.0
    %1032 = vmatprep.subr.mxu0 0.0
    %1033 = vmatpush2.msra.mxu0 0.0
    %1034 = vmatprep.subr.mxu0 0.0
    %1035 = vmatpush2.msra.mxu0 0.0
    %1036 = vmatprep.subr.mxu0 0.0
    %1037 = vmatpush2.msra.mxu0 0.0
    %1038 = vmatprep.mubr.f32.mxu0 0.0
    %1039 = vmatmul.mubr.f32.gmra.mxu0 %v972
    %v1040 = vpop.f32.mrf.mxu0
    %v1041 = vadd.f32 0.0, %v1040
    %v1042 = vpop.f32.mrf.mxu0
    %1043 = vdwg.mxu0
    %v1044 = vadd.f32 %v971, %v1041
    %v1045 = vxor.u32 %v1044, 2147483648
    %v1046 = vmul.f32 %v1045, 1.442695
    %v1047 = vpow.pop %v1046
    %v1048 = vadd.f32 %v1047, 1.0
    %v1049 = vrcp.pop %v1048
    %v1050 = vmul.f32 1.0, %v1049
    %v1051 = vtanh.pop %v1044
    %v1052 = vmul.f32 %v1050, %v969
    %1054 = vrot.lane.b32.xlu0 %v1051, 64
    %v1055 = vpop.permute.xlu0 %1054
    %v1057 = vmul.f32 %v1050, %v1055
    %1059 = vrot.lane.b32.xlu0 %v1057, 32
    %v1060 = vpop.permute.xlu0 %1059
    %v1062 = vadd.f32 %v1052, %v1060
    %v1063 = vtanh.pop %v1062
    %1065 = vrot.lane.b32.xlu0 %v1063, 64
    %v1066 = vpop.permute.xlu0 %1065
    %v1068 = vmul.f32 %v1050, %v1066
    %1070 = vrot.lane.b32.xlu0 %v1068, 32
    %v1071 = vpop.permute.xlu0 %1070
    %s1073 = scalar_lea.vmem [#allocation7], 16
    %1074 = vst.msk [vmem:[%s1073] sm:$0xf] %vm266, %v1071
    %1076 = vrot.lane.b32.xlu0 %v1062, 96
    %v1077 = vpop.permute.xlu0 %1076
    %s1079 = scalar_lea.vmem [#allocation8], 16
    %1080 = vst.msk [vmem:[%s1079] sm:$0xf] %vm266, %v1077
    %v1081 = vsel %vm75, %v1077, 0
    %1083 = vmatprep.subr.mxu0 0.0
    %1084 = vmatpush1.msra.mxu0 0.0
    %1085 = vmatprep.subr.mxu0 0.0
    %1086 = vmatpush1.msra.mxu0 0.0
    %1087 = vmatprep.subr.mxu0 0.0
    %1088 = vmatpush1.msra.mxu0 0.0
    %1089 = vmatprep.subr.mxu0 0.0
    %1090 = vmatpush1.msra.mxu0 0.0
    %1091 = vmatprep.subr.mxu0 0.0
    %1092 = vmatpush1.msra.mxu0 0.0
    %1093 = vmatprep.subr.mxu0 0.0
    %1094 = vmatpush1.msra.mxu0 0.0
    %1095 = vmatprep.subr.mxu0 0.0
    %1096 = vmatpush1.msra.mxu0 0.0
    %1097 = vmatprep.subr.mxu0 0.0
    %1098 = vmatpush1.msra.mxu0 0.0
    %1099 = vmatprep.subr.mxu0 0.0
    %1100 = vmatpush1.msra.mxu0 0.0
    %1101 = vmatprep.subr.mxu0 0.0
    %1102 = vmatpush1.msra.mxu0 0.0
    %1103 = vmatprep.subr.mxu0 0.0
    %1104 = vmatpush1.msra.mxu0 0.0
    %1105 = vmatprep.subr.mxu0 0.0
    %1106 = vmatpush1.msra.mxu0 0.0
    %1107 = vmatprep.subr.mxu0 0.0
    %1108 = vmatpush1.msra.mxu0 %v65
    %1109 = vmatprep.subr.mxu0 0.0
    %1110 = vmatpush1.msra.mxu0 %v64
    %1111 = vmatprep.subr.mxu0 0.0
    %1112 = vmatpush1.msra.mxu0 %v63
    %1113 = vmatprep.subr.mxu0 0.0
    %1114 = vmatpush1.msra.mxu0 %v62
    %1115 = vmatprep.subr.mxu0 0.0
    %1116 = vmatpush2.msra.mxu0 0.0
    %1117 = vmatprep.subr.mxu0 0.0
    %1118 = vmatpush2.msra.mxu0 0.0
    %1119 = vmatprep.subr.mxu0 0.0
    %1120 = vmatpush2.msra.mxu0 0.0
    %1121 = vmatprep.subr.mxu0 0.0
    %1122 = vmatpush2.msra.mxu0 0.0
    %1123 = vmatprep.subr.mxu0 0.0
    %1124 = vmatpush2.msra.mxu0 0.0
    %1125 = vmatprep.subr.mxu0 0.0
    %1126 = vmatpush2.msra.mxu0 0.0
    %1127 = vmatprep.subr.mxu0 0.0
    %1128 = vmatpush2.msra.mxu0 0.0
    %1129 = vmatprep.subr.mxu0 0.0
    %1130 = vmatpush2.msra.mxu0 0.0
    %1131 = vmatprep.subr.mxu0 0.0
    %1132 = vmatpush2.msra.mxu0 0.0
    %1133 = vmatprep.subr.mxu0 0.0
    %1134 = vmatpush2.msra.mxu0 0.0
    %1135 = vmatprep.subr.mxu0 0.0
    %1136 = vmatpush2.msra.mxu0 0.0
    %1137 = vmatprep.subr.mxu0 0.0
    %1138 = vmatpush2.msra.mxu0 0.0
    %1139 = vmatprep.subr.mxu0 0.0
    %1140 = vmatpush2.msra.mxu0 0.0
    %1141 = vmatprep.subr.mxu0 0.0
    %1142 = vmatpush2.msra.mxu0 0.0
    %1143 = vmatprep.subr.mxu0 0.0
    %1144 = vmatpush2.msra.mxu0 0.0
    %1145 = vmatprep.subr.mxu0 0.0
    %1146 = vmatpush2.msra.mxu0 0.0
    %1147 = vmatprep.mubr.f32.mxu0 0.0
    %1148 = vmatmul.mubr.f32.gmra.mxu0 %v1081
    %v1149 = vpop.f32.mrf.mxu0
    %v1150 = vadd.f32 %v73, %v1149
    %v1151 = vpop.f32.mrf.mxu0
    %1152 = vdwg.mxu0
    %v1153 = vtanh.pop %v1150
    %1155 = vrot.lane.b32.xlu0 %v1153, 32
    %v1156 = vpop.permute.xlu0 %1155
    %v1158 = vsub.f32 %v1062, %v1156
    %s1159 = scalar_lea.vmem %s1, 20
    %v1160 = vld [vmem:[%s1159] sm:$0xf]
    %1162 = vset.pattern.permute.xlu0 0
    %1163 = vperm.xlu0 %1162, %v1160
    %v1164 = vpop.permute.xlu0 %1163
    %v1166 = vmul.f32 %v1164, %v1153
    %1168 = vrot.lane.b32.xlu0 %v1166, 32
    %v1169 = vpop.permute.xlu0 %1168
    %v1171 = vadd.f32 %v1158, %v1169
    %s1172 = scalar_lea.vmem %s0, 20
    %v1173 = vld [vmem:[%s1172] sm:$0xf]
    %v1174 = vsel %vm75, %v1071, 0
    %1176 = vmatprep.subr.mxu0 0.0
    %1177 = vmatpush1.msra.mxu0 0.0
    %1178 = vmatprep.subr.mxu0 0.0
    %1179 = vmatpush1.msra.mxu0 0.0
    %1180 = vmatprep.subr.mxu0 0.0
    %1181 = vmatpush1.msra.mxu0 0.0
    %1182 = vmatprep.subr.mxu0 0.0
    %1183 = vmatpush1.msra.mxu0 0.0
    %1184 = vmatprep.subr.mxu0 0.0
    %1185 = vmatpush1.msra.mxu0 0.0
    %1186 = vmatprep.subr.mxu0 0.0
    %1187 = vmatpush1.msra.mxu0 0.0
    %1188 = vmatprep.subr.mxu0 0.0
    %1189 = vmatpush1.msra.mxu0 0.0
    %1190 = vmatprep.subr.mxu0 0.0
    %1191 = vmatpush1.msra.mxu0 0.0
    %1192 = vmatprep.subr.mxu0 0.0
    %1193 = vmatpush1.msra.mxu0 0.0
    %1194 = vmatprep.subr.mxu0 0.0
    %1195 = vmatpush1.msra.mxu0 0.0
    %1196 = vmatprep.subr.mxu0 0.0
    %1197 = vmatpush1.msra.mxu0 0.0
    %1198 = vmatprep.subr.mxu0 0.0
    %1199 = vmatpush1.msra.mxu0 0.0
    %1200 = vmatprep.subr.mxu0 0.0
    %1201 = vmatpush1.msra.mxu0 %v61
    %1202 = vmatprep.subr.mxu0 0.0
    %1203 = vmatpush1.msra.mxu0 %v60
    %1204 = vmatprep.subr.mxu0 0.0
    %1205 = vmatpush1.msra.mxu0 %v59
    %1206 = vmatprep.subr.mxu0 0.0
    %1207 = vmatpush1.msra.mxu0 %v58
    %1208 = vmatprep.subr.mxu0 0.0
    %1209 = vmatpush2.msra.mxu0 0.0
    %1210 = vmatprep.subr.mxu0 0.0
    %1211 = vmatpush2.msra.mxu0 0.0
    %1212 = vmatprep.subr.mxu0 0.0
    %1213 = vmatpush2.msra.mxu0 0.0
    %1214 = vmatprep.subr.mxu0 0.0
    %1215 = vmatpush2.msra.mxu0 0.0
    %1216 = vmatprep.subr.mxu0 0.0
    %1217 = vmatpush2.msra.mxu0 0.0
    %1218 = vmatprep.subr.mxu0 0.0
    %1219 = vmatpush2.msra.mxu0 0.0
    %1220 = vmatprep.subr.mxu0 0.0
    %1221 = vmatpush2.msra.mxu0 0.0
    %1222 = vmatprep.subr.mxu0 0.0
    %1223 = vmatpush2.msra.mxu0 0.0
    %1224 = vmatprep.subr.mxu0 0.0
    %1225 = vmatpush2.msra.mxu0 0.0
    %1226 = vmatprep.subr.mxu0 0.0
    %1227 = vmatpush2.msra.mxu0 0.0
    %1228 = vmatprep.subr.mxu0 0.0
    %1229 = vmatpush2.msra.mxu0 0.0
    %1230 = vmatprep.subr.mxu0 0.0
    %1231 = vmatpush2.msra.mxu0 0.0
    %1232 = vmatprep.subr.mxu0 0.0
    %1233 = vmatpush2.msra.mxu0 0.0
    %1234 = vmatprep.subr.mxu0 0.0
    %1235 = vmatpush2.msra.mxu0 0.0
    %1236 = vmatprep.subr.mxu0 0.0
    %1237 = vmatpush2.msra.mxu0 0.0
    %1238 = vmatprep.subr.mxu0 0.0
    %1239 = vmatpush2.msra.mxu0 0.0
    %1240 = vmatprep.mubr.f32.mxu0 0.0
    %1241 = vmatmul.mubr.f32.gmra.mxu0 %v1174
    %v1242 = vpop.f32.mrf.mxu0
    %v1243 = vadd.f32 0.0, %v1242
    %v1244 = vpop.f32.mrf.mxu0
    %1245 = vdwg.mxu0
    %v1246 = vadd.f32 %v1173, %v1243
    %v1247 = vxor.u32 %v1246, 2147483648
    %v1248 = vmul.f32 %v1247, 1.442695
    %v1249 = vpow.pop %v1248
    %v1250 = vadd.f32 %v1249, 1.0
    %v1251 = vrcp.pop %v1250
    %v1252 = vmul.f32 1.0, %v1251
    %v1253 = vtanh.pop %v1246
    %v1254 = vmul.f32 %v1252, %v1171
    %1256 = vrot.lane.b32.xlu0 %v1253, 64
    %v1257 = vpop.permute.xlu0 %1256
    %v1259 = vmul.f32 %v1252, %v1257
    %1261 = vrot.lane.b32.xlu0 %v1259, 32
    %v1262 = vpop.permute.xlu0 %1261
    %v1264 = vadd.f32 %v1254, %v1262
    %v1265 = vtanh.pop %v1264
    %1267 = vrot.lane.b32.xlu0 %v1265, 64
    %v1268 = vpop.permute.xlu0 %1267
    %v1270 = vmul.f32 %v1252, %v1268
    %1272 = vrot.lane.b32.xlu0 %v1270, 32
    %v1273 = vpop.permute.xlu0 %1272
    %s1275 = scalar_lea.vmem [#allocation7], 20
    %1276 = vst.msk [vmem:[%s1275] sm:$0xf] %vm266, %v1273
    %1278 = vrot.lane.b32.xlu0 %v1264, 96
    %v1279 = vpop.permute.xlu0 %1278
    %s1281 = scalar_lea.vmem [#allocation8], 20
    %1282 = vst.msk [vmem:[%s1281] sm:$0xf] %vm266, %v1279
    %v1283 = vsel %vm75, %v1279, 0
    %1285 = vmatprep.subr.mxu0 0.0
    %1286 = vmatpush1.msra.mxu0 0.0
    %1287 = vmatprep.subr.mxu0 0.0
    %1288 = vmatpush1.msra.mxu0 0.0
    %1289 = vmatprep.subr.mxu0 0.0
    %1290 = vmatpush1.msra.mxu0 0.0
    %1291 = vmatprep.subr.mxu0 0.0
    %1292 = vmatpush1.msra.mxu0 0.0
    %1293 = vmatprep.subr.mxu0 0.0
    %1294 = vmatpush1.msra.mxu0 0.0
    %1295 = vmatprep.subr.mxu0 0.0
    %1296 = vmatpush1.msra.mxu0 0.0
    %1297 = vmatprep.subr.mxu0 0.0
    %1298 = vmatpush1.msra.mxu0 0.0
    %1299 = vmatprep.subr.mxu0 0.0
    %1300 = vmatpush1.msra.mxu0 0.0
    %1301 = vmatprep.subr.mxu0 0.0
    %1302 = vmatpush1.msra.mxu0 0.0
    %1303 = vmatprep.subr.mxu0 0.0
    %1304 = vmatpush1.msra.mxu0 0.0
    %1305 = vmatprep.subr.mxu0 0.0
    %1306 = vmatpush1.msra.mxu0 0.0
    %1307 = vmatprep.subr.mxu0 0.0
    %1308 = vmatpush1.msra.mxu0 0.0
    %1309 = vmatprep.subr.mxu0 0.0
    %1310 = vmatpush1.msra.mxu0 %v65
    %1311 = vmatprep.subr.mxu0 0.0
    %1312 = vmatpush1.msra.mxu0 %v64
    %1313 = vmatprep.subr.mxu0 0.0
    %1314 = vmatpush1.msra.mxu0 %v63
    %1315 = vmatprep.subr.mxu0 0.0
    %1316 = vmatpush1.msra.mxu0 %v62
    %1317 = vmatprep.subr.mxu0 0.0
    %1318 = vmatpush2.msra.mxu0 0.0
    %1319 = vmatprep.subr.mxu0 0.0
    %1320 = vmatpush2.msra.mxu0 0.0
    %1321 = vmatprep.subr.mxu0 0.0
    %1322 = vmatpush2.msra.mxu0 0.0
    %1323 = vmatprep.subr.mxu0 0.0
    %1324 = vmatpush2.msra.mxu0 0.0
    %1325 = vmatprep.subr.mxu0 0.0
    %1326 = vmatpush2.msra.mxu0 0.0
    %1327 = vmatprep.subr.mxu0 0.0
    %1328 = vmatpush2.msra.mxu0 0.0
    %1329 = vmatprep.subr.mxu0 0.0
    %1330 = vmatpush2.msra.mxu0 0.0
    %1331 = vmatprep.subr.mxu0 0.0
    %1332 = vmatpush2.msra.mxu0 0.0
    %1333 = vmatprep.subr.mxu0 0.0
    %1334 = vmatpush2.msra.mxu0 0.0
    %1335 = vmatprep.subr.mxu0 0.0
    %1336 = vmatpush2.msra.mxu0 0.0
    %1337 = vmatprep.subr.mxu0 0.0
    %1338 = vmatpush2.msra.mxu0 0.0
    %1339 = vmatprep.subr.mxu0 0.0
    %1340 = vmatpush2.msra.mxu0 0.0
    %1341 = vmatprep.subr.mxu0 0.0
    %1342 = vmatpush2.msra.mxu0 0.0
    %1343 = vmatprep.subr.mxu0 0.0
    %1344 = vmatpush2.msra.mxu0 0.0
    %1345 = vmatprep.subr.mxu0 0.0
    %1346 = vmatpush2.msra.mxu0 0.0
    %1347 = vmatprep.subr.mxu0 0.0
    %1348 = vmatpush2.msra.mxu0 0.0
    %1349 = vmatprep.mubr.f32.mxu0 0.0
    %1350 = vmatmul.mubr.f32.gmra.mxu0 %v1283
    %v1351 = vpop.f32.mrf.mxu0
    %v1352 = vadd.f32 %v73, %v1351
    %v1353 = vpop.f32.mrf.mxu0
    %1354 = vdwg.mxu0
    %v1355 = vtanh.pop %v1352
    %1357 = vrot.lane.b32.xlu0 %v1355, 32
    %v1358 = vpop.permute.xlu0 %1357
    %v1360 = vsub.f32 %v1264, %v1358
    %s1361 = scalar_lea.vmem %s1, 24
    %v1362 = vld [vmem:[%s1361] sm:$0xf]
    %1364 = vset.pattern.permute.xlu0 0
    %1365 = vperm.xlu0 %1364, %v1362
    %v1366 = vpop.permute.xlu0 %1365
    %v1368 = vmul.f32 %v1366, %v1355
    %1370 = vrot.lane.b32.xlu0 %v1368, 32
    %v1371 = vpop.permute.xlu0 %1370
    %v1373 = vadd.f32 %v1360, %v1371
    %s1374 = scalar_lea.vmem %s0, 24
    %v1375 = vld [vmem:[%s1374] sm:$0xf]
    %v1376 = vsel %vm75, %v1273, 0
    %1378 = vmatprep.subr.mxu0 0.0
    %1379 = vmatpush1.msra.mxu0 0.0
    %1380 = vmatprep.subr.mxu0 0.0
    %1381 = vmatpush1.msra.mxu0 0.0
    %1382 = vmatprep.subr.mxu0 0.0
    %1383 = vmatpush1.msra.mxu0 0.0
    %1384 = vmatprep.subr.mxu0 0.0
    %1385 = vmatpush1.msra.mxu0 0.0
    %1386 = vmatprep.subr.mxu0 0.0
    %1387 = vmatpush1.msra.mxu0 0.0
    %1388 = vmatprep.subr.mxu0 0.0
    %1389 = vmatpush1.msra.mxu0 0.0
    %1390 = vmatprep.subr.mxu0 0.0
    %1391 = vmatpush1.msra.mxu0 0.0
    %1392 = vmatprep.subr.mxu0 0.0
    %1393 = vmatpush1.msra.mxu0 0.0
    %1394 = vmatprep.subr.mxu0 0.0
    %1395 = vmatpush1.msra.mxu0 0.0
    %1396 = vmatprep.subr.mxu0 0.0
    %1397 = vmatpush1.msra.mxu0 0.0
    %1398 = vmatprep.subr.mxu0 0.0
    %1399 = vmatpush1.msra.mxu0 0.0
    %1400 = vmatprep.subr.mxu0 0.0
    %1401 = vmatpush1.msra.mxu0 0.0
    %1402 = vmatprep.subr.mxu0 0.0
    %1403 = vmatpush1.msra.mxu0 %v61
    %1404 = vmatprep.subr.mxu0 0.0
    %1405 = vmatpush1.msra.mxu0 %v60
    %1406 = vmatprep.subr.mxu0 0.0
    %1407 = vmatpush1.msra.mxu0 %v59
    %1408 = vmatprep.subr.mxu0 0.0
    %1409 = vmatpush1.msra.mxu0 %v58
    %1410 = vmatprep.subr.mxu0 0.0
    %1411 = vmatpush2.msra.mxu0 0.0
    %1412 = vmatprep.subr.mxu0 0.0
    %1413 = vmatpush2.msra.mxu0 0.0
    %1414 = vmatprep.subr.mxu0 0.0
    %1415 = vmatpush2.msra.mxu0 0.0
    %1416 = vmatprep.subr.mxu0 0.0
    %1417 = vmatpush2.msra.mxu0 0.0
    %1418 = vmatprep.subr.mxu0 0.0
    %1419 = vmatpush2.msra.mxu0 0.0
    %1420 = vmatprep.subr.mxu0 0.0
    %1421 = vmatpush2.msra.mxu0 0.0
    %1422 = vmatprep.subr.mxu0 0.0
    %1423 = vmatpush2.msra.mxu0 0.0
    %1424 = vmatprep.subr.mxu0 0.0
    %1425 = vmatpush2.msra.mxu0 0.0
    %1426 = vmatprep.subr.mxu0 0.0
    %1427 = vmatpush2.msra.mxu0 0.0
    %1428 = vmatprep.subr.mxu0 0.0
    %1429 = vmatpush2.msra.mxu0 0.0
    %1430 = vmatprep.subr.mxu0 0.0
    %1431 = vmatpush2.msra.mxu0 0.0
    %1432 = vmatprep.subr.mxu0 0.0
    %1433 = vmatpush2.msra.mxu0 0.0
    %1434 = vmatprep.subr.mxu0 0.0
    %1435 = vmatpush2.msra.mxu0 0.0
    %1436 = vmatprep.subr.mxu0 0.0
    %1437 = vmatpush2.msra.mxu0 0.0
    %1438 = vmatprep.subr.mxu0 0.0
    %1439 = vmatpush2.msra.mxu0 0.0
    %1440 = vmatprep.subr.mxu0 0.0
    %1441 = vmatpush2.msra.mxu0 0.0
    %1442 = vmatprep.mubr.f32.mxu0 0.0
    %1443 = vmatmul.mubr.f32.gmra.mxu0 %v1376
    %v1444 = vpop.f32.mrf.mxu0
    %v1445 = vadd.f32 0.0, %v1444
    %v1446 = vpop.f32.mrf.mxu0
    %1447 = vdwg.mxu0
    %v1448 = vadd.f32 %v1375, %v1445
    %v1449 = vxor.u32 %v1448, 2147483648
    %v1450 = vmul.f32 %v1449, 1.442695
    %v1451 = vpow.pop %v1450
    %v1452 = vadd.f32 %v1451, 1.0
    %v1453 = vrcp.pop %v1452
    %v1454 = vmul.f32 1.0, %v1453
    %v1455 = vtanh.pop %v1448
    %v1456 = vmul.f32 %v1454, %v1373
    %1458 = vrot.lane.b32.xlu0 %v1455, 64
    %v1459 = vpop.permute.xlu0 %1458
    %v1461 = vmul.f32 %v1454, %v1459
    %1463 = vrot.lane.b32.xlu0 %v1461, 32
    %v1464 = vpop.permute.xlu0 %1463
    %v1466 = vadd.f32 %v1456, %v1464
    %v1467 = vtanh.pop %v1466
    %1469 = vrot.lane.b32.xlu0 %v1467, 64
    %v1470 = vpop.permute.xlu0 %1469
    %v1472 = vmul.f32 %v1454, %v1470
    %1474 = vrot.lane.b32.xlu0 %v1472, 32
    %v1475 = vpop.permute.xlu0 %1474
    %s1477 = scalar_lea.vmem [#allocation7], 24
    %1478 = vst.msk [vmem:[%s1477] sm:$0xf] %vm266, %v1475
    %1480 = vrot.lane.b32.xlu0 %v1466, 96
    %v1481 = vpop.permute.xlu0 %1480
    %s1483 = scalar_lea.vmem [#allocation8], 24
    %1484 = vst.msk [vmem:[%s1483] sm:$0xf] %vm266, %v1481
    %v1485 = vsel %vm75, %v1481, 0
    %1487 = vmatprep.subr.mxu0 0.0
    %1488 = vmatpush1.msra.mxu0 0.0
    %1489 = vmatprep.subr.mxu0 0.0
    %1490 = vmatpush1.msra.mxu0 0.0
    %1491 = vmatprep.subr.mxu0 0.0
    %1492 = vmatpush1.msra.mxu0 0.0
    %1493 = vmatprep.subr.mxu0 0.0
    %1494 = vmatpush1.msra.mxu0 0.0
    %1495 = vmatprep.subr.mxu0 0.0
    %1496 = vmatpush1.msra.mxu0 0.0
    %1497 = vmatprep.subr.mxu0 0.0
    %1498 = vmatpush1.msra.mxu0 0.0
    %1499 = vmatprep.subr.mxu0 0.0
    %1500 = vmatpush1.msra.mxu0 0.0
    %1501 = vmatprep.subr.mxu0 0.0
    %1502 = vmatpush1.msra.mxu0 0.0
    %1503 = vmatprep.subr.mxu0 0.0
    %1504 = vmatpush1.msra.mxu0 0.0
    %1505 = vmatprep.subr.mxu0 0.0
    %1506 = vmatpush1.msra.mxu0 0.0
    %1507 = vmatprep.subr.mxu0 0.0
    %1508 = vmatpush1.msra.mxu0 0.0
    %1509 = vmatprep.subr.mxu0 0.0
    %1510 = vmatpush1.msra.mxu0 0.0
    %1511 = vmatprep.subr.mxu0 0.0
    %1512 = vmatpush1.msra.mxu0 %v65
    %1513 = vmatprep.subr.mxu0 0.0
    %1514 = vmatpush1.msra.mxu0 %v64
    %1515 = vmatprep.subr.mxu0 0.0
    %1516 = vmatpush1.msra.mxu0 %v63
    %1517 = vmatprep.subr.mxu0 0.0
    %1518 = vmatpush1.msra.mxu0 %v62
    %1519 = vmatprep.subr.mxu0 0.0
    %1520 = vmatpush2.msra.mxu0 0.0
    %1521 = vmatprep.subr.mxu0 0.0
    %1522 = vmatpush2.msra.mxu0 0.0
    %1523 = vmatprep.subr.mxu0 0.0
    %1524 = vmatpush2.msra.mxu0 0.0
    %1525 = vmatprep.subr.mxu0 0.0
    %1526 = vmatpush2.msra.mxu0 0.0
    %1527 = vmatprep.subr.mxu0 0.0
    %1528 = vmatpush2.msra.mxu0 0.0
    %1529 = vmatprep.subr.mxu0 0.0
    %1530 = vmatpush2.msra.mxu0 0.0
    %1531 = vmatprep.subr.mxu0 0.0
    %1532 = vmatpush2.msra.mxu0 0.0
    %1533 = vmatprep.subr.mxu0 0.0
    %1534 = vmatpush2.msra.mxu0 0.0
    %1535 = vmatprep.subr.mxu0 0.0
    %1536 = vmatpush2.msra.mxu0 0.0
    %1537 = vmatprep.subr.mxu0 0.0
    %1538 = vmatpush2.msra.mxu0 0.0
    %1539 = vmatprep.subr.mxu0 0.0
    %1540 = vmatpush2.msra.mxu0 0.0
    %1541 = vmatprep.subr.mxu0 0.0
    %1542 = vmatpush2.msra.mxu0 0.0
    %1543 = vmatprep.subr.mxu0 0.0
    %1544 = vmatpush2.msra.mxu0 0.0
    %1545 = vmatprep.subr.mxu0 0.0
    %1546 = vmatpush2.msra.mxu0 0.0
    %1547 = vmatprep.subr.mxu0 0.0
    %1548 = vmatpush2.msra.mxu0 0.0
    %1549 = vmatprep.subr.mxu0 0.0
    %1550 = vmatpush2.msra.mxu0 0.0
    %1551 = vmatprep.mubr.f32.mxu0 0.0
    %1552 = vmatmul.mubr.f32.gmra.mxu0 %v1485
    %v1553 = vpop.f32.mrf.mxu0
    %v1554 = vadd.f32 %v73, %v1553
    %v1555 = vpop.f32.mrf.mxu0
    %1556 = vdwg.mxu0
    %v1557 = vtanh.pop %v1554
    %1559 = vrot.lane.b32.xlu0 %v1557, 32
    %v1560 = vpop.permute.xlu0 %1559
    %v1562 = vsub.f32 %v1466, %v1560
    %s1563 = scalar_lea.vmem %s1, 28
    %v1564 = vld [vmem:[%s1563] sm:$0xf]
    %1566 = vset.pattern.permute.xlu0 0
    %1567 = vperm.xlu0 %1566, %v1564
    %v1568 = vpop.permute.xlu0 %1567
    %v1570 = vmul.f32 %v1568, %v1557
    %1572 = vrot.lane.b32.xlu0 %v1570, 32
    %v1573 = vpop.permute.xlu0 %1572
    %v1575 = vadd.f32 %v1562, %v1573
    %s1576 = scalar_lea.vmem %s0, 28
    %v1577 = vld [vmem:[%s1576] sm:$0xf]
    %v1578 = vsel %vm75, %v1475, 0
    %1580 = vmatprep.subr.mxu0 0.0
    %1581 = vmatpush1.msra.mxu0 0.0
    %1582 = vmatprep.subr.mxu0 0.0
    %1583 = vmatpush1.msra.mxu0 0.0
    %1584 = vmatprep.subr.mxu0 0.0
    %1585 = vmatpush1.msra.mxu0 0.0
    %1586 = vmatprep.subr.mxu0 0.0
    %1587 = vmatpush1.msra.mxu0 0.0
    %1588 = vmatprep.subr.mxu0 0.0
    %1589 = vmatpush1.msra.mxu0 0.0
    %1590 = vmatprep.subr.mxu0 0.0
    %1591 = vmatpush1.msra.mxu0 0.0
    %1592 = vmatprep.subr.mxu0 0.0
    %1593 = vmatpush1.msra.mxu0 0.0
    %1594 = vmatprep.subr.mxu0 0.0
    %1595 = vmatpush1.msra.mxu0 0.0
    %1596 = vmatprep.subr.mxu0 0.0
    %1597 = vmatpush1.msra.mxu0 0.0
    %1598 = vmatprep.subr.mxu0 0.0
    %1599 = vmatpush1.msra.mxu0 0.0
    %1600 = vmatprep.subr.mxu0 0.0
    %1601 = vmatpush1.msra.mxu0 0.0
    %1602 = vmatprep.subr.mxu0 0.0
    %1603 = vmatpush1.msra.mxu0 0.0
    %1604 = vmatprep.subr.mxu0 0.0
    %1605 = vmatpush1.msra.mxu0 %v61
    %1606 = vmatprep.subr.mxu0 0.0
    %1607 = vmatpush1.msra.mxu0 %v60
    %1608 = vmatprep.subr.mxu0 0.0
    %1609 = vmatpush1.msra.mxu0 %v59
    %1610 = vmatprep.subr.mxu0 0.0
    %1611 = vmatpush1.msra.mxu0 %v58
    %1612 = vmatprep.subr.mxu0 0.0
    %1613 = vmatpush2.msra.mxu0 0.0
    %1614 = vmatprep.subr.mxu0 0.0
    %1615 = vmatpush2.msra.mxu0 0.0
    %1616 = vmatprep.subr.mxu0 0.0
    %1617 = vmatpush2.msra.mxu0 0.0
    %1618 = vmatprep.subr.mxu0 0.0
    %1619 = vmatpush2.msra.mxu0 0.0
    %1620 = vmatprep.subr.mxu0 0.0
    %1621 = vmatpush2.msra.mxu0 0.0
    %1622 = vmatprep.subr.mxu0 0.0
    %1623 = vmatpush2.msra.mxu0 0.0
    %1624 = vmatprep.subr.mxu0 0.0
    %1625 = vmatpush2.msra.mxu0 0.0
    %1626 = vmatprep.subr.mxu0 0.0
    %1627 = vmatpush2.msra.mxu0 0.0
    %1628 = vmatprep.subr.mxu0 0.0
    %1629 = vmatpush2.msra.mxu0 0.0
    %1630 = vmatprep.subr.mxu0 0.0
    %1631 = vmatpush2.msra.mxu0 0.0
    %1632 = vmatprep.subr.mxu0 0.0
    %1633 = vmatpush2.msra.mxu0 0.0
    %1634 = vmatprep.subr.mxu0 0.0
    %1635 = vmatpush2.msra.mxu0 0.0
    %1636 = vmatprep.subr.mxu0 0.0
    %1637 = vmatpush2.msra.mxu0 0.0
    %1638 = vmatprep.subr.mxu0 0.0
    %1639 = vmatpush2.msra.mxu0 0.0
    %1640 = vmatprep.subr.mxu0 0.0
    %1641 = vmatpush2.msra.mxu0 0.0
    %1642 = vmatprep.subr.mxu0 0.0
    %1643 = vmatpush2.msra.mxu0 0.0
    %1644 = vmatprep.mubr.f32.mxu0 0.0
    %1645 = vmatmul.mubr.f32.gmra.mxu0 %v1578
    %v1646 = vpop.f32.mrf.mxu0
    %v1647 = vadd.f32 0.0, %v1646
    %v1648 = vpop.f32.mrf.mxu0
    %1649 = vdwg.mxu0
    %v1650 = vadd.f32 %v1577, %v1647
    %v1651 = vxor.u32 %v1650, 2147483648
    %v1652 = vmul.f32 %v1651, 1.442695
    %v1653 = vpow.pop %v1652
    %v1654 = vadd.f32 %v1653, 1.0
    %v1655 = vrcp.pop %v1654
    %v1656 = vmul.f32 1.0, %v1655
    %v1657 = vtanh.pop %v1650
    %v1658 = vmul.f32 %v1656, %v1575
    %1660 = vrot.lane.b32.xlu0 %v1657, 64
    %v1661 = vpop.permute.xlu0 %1660
    %v1663 = vmul.f32 %v1656, %v1661
    %1665 = vrot.lane.b32.xlu0 %v1663, 32
    %v1666 = vpop.permute.xlu0 %1665
    %v1668 = vadd.f32 %v1658, %v1666
    %v1669 = vtanh.pop %v1668
    %1671 = vrot.lane.b32.xlu0 %v1669, 64
    %v1672 = vpop.permute.xlu0 %1671
    %v1674 = vmul.f32 %v1656, %v1672
    %1676 = vrot.lane.b32.xlu0 %v1674, 32
    %v1677 = vpop.permute.xlu0 %1676
    %s1679 = scalar_lea.vmem [#allocation7], 28
    %1680 = vst.msk [vmem:[%s1679] sm:$0xf] %vm266, %v1677
    %1682 = vrot.lane.b32.xlu0 %v1668, 96
    %v1683 = vpop.permute.xlu0 %1682
    %s1685 = scalar_lea.vmem [#allocation8], 28
    %1686 = vst.msk [vmem:[%s1685] sm:$0xf] %vm266, %v1683
    // Predicated region
    $region38: #{tpu_custom_call.1} parent=1 // pred_check
      _
    $region39: #{tpu_custom_call.1} parent=1 // pred_check_branch
      %1688 = sbr.rel (0) target = $region41
    $region40: #{tpu_custom_call.1} parent=1 // pred_region
      %s1690 = ssub.s32 512, 512
      %1691 = vsyncadd [#allocation4], %s1690
      %s1692 = sshll.u32 [#allocation7], 4
      %s1693 = int_to_ptr.vmem [resolvable:$true] %s1692
      %1698 = dma.vmem_to_hbm [thread:$0]  %s1693, 512, %s7, [#allocation4], 64, 64, 4
    $region41: #{tpu_custom_call.1} parent=1 // pred_fallthru
      _
    // Predicated region
    $region42: #{tpu_custom_call.1} parent=1 // pred_check
      _
    $region43: #{tpu_custom_call.1} parent=1 // pred_check_branch
      %1700 = sbr.rel (0) target = $region45
    $region44: #{tpu_custom_call.1} parent=1 // pred_region
      %s1702 = ssub.s32 512, 512
      %1703 = vsyncadd [#allocation9], %s1702
      %s1704 = sshll.u32 [#allocation8], 4
      %s1705 = int_to_ptr.vmem [resolvable:$true] %s1704
      %1710 = dma.vmem_to_hbm [thread:$0]  %s1705, 512, %s8, [#allocation9], 64, 64, 4
    $region45: #{tpu_custom_call.1} parent=1 // pred_fallthru
      _
    // Predicated region
    $region46: #{tpu_custom_call.1} parent=1 // pred_check
      _
    $region47: #{tpu_custom_call.1} parent=1 // pred_check_branch
      %1712 = sbr.rel (0) target = $region49
    $region48: #{tpu_custom_call.1} parent=1 // pred_region
      %1713 = dma.done [#allocation4], 512
    $region49: #{tpu_custom_call.1} parent=1 // pred_fallthru
      _
    // Predicated region
    $region50: #{tpu_custom_call.1} parent=1 // pred_check
      _
    $region51: #{tpu_custom_call.1} parent=1 // pred_check_branch
      %1715 = sbr.rel (0) target = $region53
    $region52: #{tpu_custom_call.1} parent=1 // pred_region
      %1716 = dma.done [#allocation9], 512
    $region53: #{tpu_custom_call.1} parent=1 // pred_fallthru
      _
    %1717 = vsyncpa [#allocation3], 1
    %1718 = vsyncpa [#allocation6], 1
    %1719 = vsyncpa [#allocation4], 1
    %1720 = vsyncpa [#allocation9], 1

</llo_original>
